<compile_context>
chip_gen: v7x
topology: tpu7x:2x2x1
jax: 0.10.0
libtpu: 0.0.40
codegen_flags: <defaults>
</compile_context>

<pallas_src>
import functools

import jax
import jax.numpy as jnp
import numpy as np
from jax.experimental import pallas as pl
from jax.experimental.pallas import tpu as pltpu


def _convlstm_seq_kernel(gx_ref, wh_ref, out_ref,
                         h_scr, c_scr,
                         *, H, W, KH, KW, pad_h, col0, hidden):
    """One (batch, timestep) grid step of the ConvLSTM recurrence.

    gx_ref  : (1, H*W, 4*hidden)      f32, precomputed conv_x(x_t) for (b, t)
    wh_ref  : (KH*KW*hidden, 4*hidden) bf16, h-conv weight, im2col-folded
    out_ref : (1, H*W, hidden)        f32, h_t for this (b, t)
    h_scr   : (Hp, wpad, hidden)      f32 VMEM, padded recurrent h (border = 0)
    c_scr   : (H*W, hidden)           f32 VMEM, recurrent cell state
    """
    t = pl.program_id(1)

    # Reset the recurrent state at the start of each batch element's sequence.
    @pl.when(t == 0)
    def _init_state():
        h_scr[...] = jnp.zeros_like(h_scr)
        c_scr[...] = jnp.zeros_like(c_scr)

    c0 = col0 - (KW // 2)  # buffer column holding padded-column 0

    # h-conv as ONE matmul: all (ky, kx) taps folded into the contraction.
    # K index order = (ky major, kx, channel), matching the weight reshape.
    pieces = []
    for ky in range(KH):
        for kx in range(KW):
            pieces.append(h_scr[ky:ky + H, c0 + kx:c0 + kx + W, :])
    patch = jnp.concatenate(pieces, axis=-1)              # (H, W, KH*KW*Ch) f32
    patch = patch.reshape(H * W, KH * KW * hidden)        # free: W % 8 == 0
    patch = patch.astype(jnp.bfloat16)

    # Register accumulation: gx partial + single MXU dot (f32 accumulate).
    acc = gx_ref[0] + jnp.dot(patch, wh_ref[...],
                              preferred_element_type=jnp.float32)  # (H*W, 4Ch)

    # gate order matches torch.split(conv_out, hidden, dim=1): i, f, o, g
    ifo = jax.nn.sigmoid(acc[:, :3 * hidden])   # one fused sigmoid for i, f, o
    g = jnp.tanh(acc[:, 3 * hidden:])
    i = ifo[:, 0 * hidden:1 * hidden]
    f = ifo[:, 1 * hidden:2 * hidden]
    o = ifo[:, 2 * hidden:3 * hidden]

    c_next = f * c_scr[...] + i * g             # (H*W, hidden) f32
    h_next = o * jnp.tanh(c_next)

    c_scr[...] = c_next
    # Write h back into the interior of the padded state buffer (col0 is a
    # multiple of 8 -> sublane-aligned store; the zero border stays intact).
    h_scr[pad_h:pad_h + H, col0:col0 + W, :] = h_next.reshape(H, W, hidden)
    # TODO(synk): with hidden=32 this is a masked 32-of-128 lane store; a
    # lane-dense slab would need a sublane->lane relayout of h_next, skipped.
    out_ref[0] = h_next


def conv_lstm_forward(x, weight, *, kernel_size, hidden_dims):
    """ConvLSTM forward.

    x      : (B, Cx, T, H, W) float32  (PyTorch layout)
    weight : (4*hidden, Cx+hidden, KH, KW) float32 (nn.Conv2d OIHW, no bias)
    returns: (B, hidden, T, H, W) float32 -- the h_t output sequence.
    """
    B, Cx, T, H, W = x.shape
    KH, KW = kernel_size
    assert KH % 2 == 1 and KW % 2 == 1, "same-padding assumes odd kernel"
    ph, pw = KH // 2, KW // 2
    Hp = H + 2 * ph
    Ch = hidden_dims
    Cin = Cx + Ch
    assert weight.shape == (4 * Ch, Cin, KH, KW)

    # Interior columns start at a sublane-aligned offset so the in-kernel h
    # state update is an aligned store; wpad is the padded buffer width.
    col0 = ((pw + 7) // 8) * 8
    wpad = -(-(col0 + W + pw) // 8) * 8

    # ---- hoisted input convolution (outside the recurrent hot loop) ----
    # gx[b*T+t] = conv_x(x_t)  -- fully parallel over B*T, one XLA conv.
    x_nhwc = jnp.transpose(x, (0, 2, 3, 4, 1)).reshape(B * T, H, W, Cx)
    wx = jnp.transpose(weight[:, :Cx], (2, 3, 1, 0)).astype(jnp.bfloat16)  # HWIO
    gx = jax.lax.conv_general_dilated(
        x_nhwc.astype(jnp.bfloat16), wx,
        window_strides=(1, 1), padding=((ph, ph), (pw, pw)),
        dimension_numbers=("NHWC", "HWIO", "NHWC"),
        preferred_element_type=jnp.float32)               # (B*T, H, W, 4*Ch)
    gx = gx.reshape(B * T, H * W, 4 * Ch)

    # h-conv weight, im2col-folded: K index = (ky*KW + kx)*Ch + ch; bf16 MXU.
    wh = jnp.transpose(weight[:, Cx:], (2, 3, 1, 0)).reshape(KH * KW * Ch, 4 * Ch)
    wh = wh.astype(jnp.bfloat16)

    kernel = functools.partial(
        _convlstm_seq_kernel, H=H, W=W, KH=KH, KW=KW,
        pad_h=ph, col0=col0, hidden=Ch)

    out = pl.pallas_call(
        kernel,
        out_shape=jax.ShapeDtypeStruct((B * T, H * W, Ch), jnp.float32),
        grid_spec=pltpu.PrefetchScalarGridSpec(
            num_scalar_prefetch=0,
            grid=(B, T),                      # batch parallel, time sequential
            in_specs=[
                pl.BlockSpec((1, H * W, 4 * Ch),
                             lambda b, t: (b * T + t, 0, 0)),
                # Constant index map -> the weight block is not re-fetched per
                # step.  (Single-buffering it would only save ~72 KiB VMEM.)
                pl.BlockSpec((KH * KW * Ch, 4 * Ch),
                             lambda b, t: (0, 0)),
            ],
            out_specs=pl.BlockSpec((1, H * W, Ch),
                                   lambda b, t: (b * T + t, 0, 0)),
            scratch_shapes=[
                pltpu.VMEM((Hp, wpad, Ch), jnp.float32),    # padded h state
                pltpu.VMEM((H * W, Ch), jnp.float32),       # c state
            ],
        ),
        compiler_params=pltpu.CompilerParams(
            dimension_semantics=("parallel", "arbitrary"),
            # Per-step VMEM use is < 1 MiB at these shapes; for large H/W add
            # an H-tile grid axis instead of raising the scoped-VMEM limit.
        ),
    )(gx, wh)

    out = out.reshape(B, T, H, W, Ch)
    return jnp.transpose(out, (0, 4, 1, 2, 3))      # (B, hidden, T, H, W)


def _reference_conv_lstm(x, weight, *, kernel_size, hidden_dims):
    """Pure-JAX reference (precision-matched: bf16 conv operands, f32 math)."""
    B, Cx, T, H, W = x.shape
    KH, KW = kernel_size
    pad = ((KH // 2, KH // 2), (KW // 2, KW // 2))
    w_bf = weight.astype(jnp.bfloat16)
    h = jnp.zeros((B, hidden_dims, H, W), jnp.float32)
    c = jnp.zeros((B, hidden_dims, H, W), jnp.float32)
    outs = []
    for t in range(T):
        comb = jnp.concatenate(
            [x[:, :, t].astype(jnp.bfloat16), h.astype(jnp.bfloat16)], axis=1)
        cc = jax.lax.conv_general_dilated(
            comb, w_bf, window_strides=(1, 1), padding=pad,
            dimension_numbers=("NCHW", "OIHW", "NCHW"),
            preferred_element_type=jnp.float32)
        cc_i, cc_f, cc_o, cc_g = jnp.split(cc, 4, axis=1)
        i = jax.nn.sigmoid(cc_i)
        f = jax.nn.sigmoid(cc_f)
        o = jax.nn.sigmoid(cc_o)
        g = jnp.tanh(cc_g)
        c = f * c + i * g
        h = o * jnp.tanh(c)
        outs.append(h)
    return jnp.stack(outs, axis=2)                   # (B, hidden, T, H, W)


if __name__ == "__main__":
    # ConvLSTM(in_channels=4, out_channels=32, kernel_size=(3, 3)) on a
    # (B=2, C=4, T=8, H=W=16) input.
    B, in_channels, hidden_dims = 2, 4, 32
    T, H, W = 8, 16, 16
    kernel_size = (3, 3)
    Cin = in_channels + hidden_dims

    key = jax.random.PRNGKey(0)
    kx_key, kw_key = jax.random.split(key)
    x = jax.random.normal(kx_key, (B, in_channels, T, H, W), jnp.float32)

    # Deterministic Conv2d-style init (kaiming-uniform-like bound); the module
    # passes bias=None to nn.Conv2d, so there is no bias term.
    fan_in = Cin * kernel_size[0] * kernel_size[1]
    bound = 1.0 / np.sqrt(fan_in)
    weight = jax.random.uniform(
        kw_key, (4 * hidden_dims, Cin, kernel_size[0], kernel_size[1]),
        jnp.float32, minval=-bound, maxval=bound)

    fwd = jax.jit(functools.partial(
        conv_lstm_forward, kernel_size=kernel_size, hidden_dims=hidden_dims))
    out = fwd(x, weight)
    jax.block_until_ready(out)

    ref = _reference_conv_lstm(x, weight, kernel_size=kernel_size,
                               hidden_dims=hidden_dims)
    np.testing.assert_allclose(np.asarray(out), np.asarray(ref),
                               rtol=1e-2, atol=1e-2)

    print("KERNEL_OK")
</pallas_src>

<mosaic_0001>
module attributes {stable_mosaic.version = 11 : i64} {
  func.func @_convlstm_seq_kernel(%arg0: i32, %arg1: i32, %arg2: memref<1x256x128xf32, #tpu.memory_space<vmem>>, %arg3: memref<288x128xbf16, #tpu.memory_space<vmem>>, %arg4: memref<1x256x32xf32, #tpu.memory_space<vmem>>, %arg5: memref<18x32x32xf32, #tpu.memory_space<vmem>>, %arg6: memref<256x32xf32, #tpu.memory_space<vmem>>) attributes {dimension_semantics = [#tpu.dimension_semantics<parallel>, #tpu.dimension_semantics<arbitrary>], iteration_bounds = array<i64: 2, 8>, scalar_prefetch = 0 : i64, scratch_operands = 2 : i64, tpu.core_type = #tpu.core_type<tc>, window_params = [{transform_indices = @transform_0, window_bounds = array<i64: 1, 256, 128>}, {pipeline_mode = #tpu.pipeline_mode<synchronous>, transform_indices = @transform_1, window_bounds = array<i64: 288, 128>}, {transform_indices = @transform_2, window_bounds = array<i64: 1, 256, 32>}]} {
    %c0_i32 = arith.constant 0 : i32
    %0 = arith.cmpi eq, %arg1, %c0_i32 : i32
    %1 = arith.extui %0 : i1 to i32
    %c0_i32_0 = arith.constant 0 : i32
    %2 = arith.cmpi ne, %1, %c0_i32_0 : i32
    scf.if %2 {
      %cst_38 = arith.constant 0.000000e+00 : f32
      %43 = vector.broadcast %cst_38 : f32 to vector<18x32x32xf32>
      %c0_39 = arith.constant 0 : index
      %c0_40 = arith.constant 0 : index
      %c0_41 = arith.constant 0 : index
      %44 = vector.load %arg5[%c0_39, %c0_40, %c0_41] : memref<18x32x32xf32, #tpu.memory_space<vmem>>, vector<18x32x32xf32>
      tpu.vector_store %arg5[%c0_39, %c0_40, %c0_41], %43 {strides = array<i32>} : memref<18x32x32xf32, #tpu.memory_space<vmem>>, vector<18x32x32xf32>,
      %cst_42 = arith.constant 0.000000e+00 : f32
      %45 = vector.broadcast %cst_42 : f32 to vector<256x32xf32>
      %c0_43 = arith.constant 0 : index
      %c0_44 = arith.constant 0 : index
      %46 = vector.load %arg6[%c0_43, %c0_44] : memref<256x32xf32, #tpu.memory_space<vmem>>, vector<256x32xf32>
      tpu.vector_store %arg6[%c0_43, %c0_44], %45 {strides = array<i32>} : memref<256x32xf32, #tpu.memory_space<vmem>>, vector<256x32xf32>,
    } else {
    }
    %c0 = arith.constant 0 : index
    %c7 = arith.constant 7 : index
    %c0_1 = arith.constant 0 : index
    %3 = vector.load %arg5[%c0, %c7, %c0_1] : memref<18x32x32xf32, #tpu.memory_space<vmem>>, vector<16x16x32xf32>
    %c0_2 = arith.constant 0 : index
    %c8 = arith.constant 8 : index
    %c0_3 = arith.constant 0 : index
    %4 = vector.load %arg5[%c0_2, %c8, %c0_3] : memref<18x32x32xf32, #tpu.memory_space<vmem>>, vector<16x16x32xf32>
    %c0_4 = arith.constant 0 : index
    %c9 = arith.constant 9 : index
    %c0_5 = arith.constant 0 : index
    %5 = vector.load %arg5[%c0_4, %c9, %c0_5] : memref<18x32x32xf32, #tpu.memory_space<vmem>>, vector<16x16x32xf32>
    %c1 = arith.constant 1 : index
    %c7_6 = arith.constant 7 : index
    %c0_7 = arith.constant 0 : index
    %6 = vector.load %arg5[%c1, %c7_6, %c0_7] : memref<18x32x32xf32, #tpu.memory_space<vmem>>, vector<16x16x32xf32>
    %c1_8 = arith.constant 1 : index
    %c8_9 = arith.constant 8 : index
    %c0_10 = arith.constant 0 : index
    %7 = vector.load %arg5[%c1_8, %c8_9, %c0_10] : memref<18x32x32xf32, #tpu.memory_space<vmem>>, vector<16x16x32xf32>
    %c1_11 = arith.constant 1 : index
    %c9_12 = arith.constant 9 : index
    %c0_13 = arith.constant 0 : index
    %8 = vector.load %arg5[%c1_11, %c9_12, %c0_13] : memref<18x32x32xf32, #tpu.memory_space<vmem>>, vector<16x16x32xf32>
    %c2 = arith.constant 2 : index
    %c7_14 = arith.constant 7 : index
    %c0_15 = arith.constant 0 : index
    %9 = vector.load %arg5[%c2, %c7_14, %c0_15] : memref<18x32x32xf32, #tpu.memory_space<vmem>>, vector<16x16x32xf32>
    %c2_16 = arith.constant 2 : index
    %c8_17 = arith.constant 8 : index
    %c0_18 = arith.constant 0 : index
    %10 = vector.load %arg5[%c2_16, %c8_17, %c0_18] : memref<18x32x32xf32, #tpu.memory_space<vmem>>, vector<16x16x32xf32>
    %c2_19 = arith.constant 2 : index
    %c9_20 = arith.constant 9 : index
    %c0_21 = arith.constant 0 : index
    %11 = vector.load %arg5[%c2_19, %c9_20, %c0_21] : memref<18x32x32xf32, #tpu.memory_space<vmem>>, vector<16x16x32xf32>
    %12 = tpu.concatenate %3, %4, %5, %6, %7, %8, %9, %10, %11 in 2 : vector<16x16x32xf32>, vector<16x16x32xf32>, vector<16x16x32xf32>, vector<16x16x32xf32>, vector<16x16x32xf32>, vector<16x16x32xf32>, vector<16x16x32xf32>, vector<16x16x32xf32>, vector<16x16x32xf32> -> vector<16x16x288xf32>
    %13 = vector.shape_cast %12 : vector<16x16x288xf32> to vector<256x288xf32>
    %14 = arith.truncf %13 : vector<256x288xf32> to vector<256x288xbf16>
    %c0_22 = arith.constant 0 : index
    %c0_23 = arith.constant 0 : index
    %c0_24 = arith.constant 0 : index
    %15 = vector.load %arg2[%c0_22, %c0_23, %c0_24] : memref<1x256x128xf32, #tpu.memory_space<vmem>>, vector<1x256x128xf32>
    %16 = vector.shape_cast %15 : vector<1x256x128xf32> to vector<256x128xf32>
    %c0_25 = arith.constant 0 : index
    %c0_26 = arith.constant 0 : index
    %17 = vector.load %arg3[%c0_25, %c0_26] : memref<288x128xbf16, #tpu.memory_space<vmem>>, vector<288x128xbf16>
    %cst = arith.constant dense<0.000000e+00> : vector<256x128xf32>
    %18 = tpu.matmul %14, %17, %cst {dimension_numbers = #tpu.dot_dimension_numbers<[1], [0], [0], [1], [0, 0, 1, 1], [], []>} : vector<256x288xbf16>, vector<288x128xbf16>, vector<256x128xf32> -> vector<256x128xf32>
    %19 = arith.addf %16, %18 : vector<256x128xf32>
    %20 = vector.extract_strided_slice %19 {offsets = [0, 0], sizes = [256, 96], strides = [1, 1]} : vector<256x128xf32> to vector<256x96xf32>
    %21 = arith.negf %20 : vector<256x96xf32>
    %22 = math.exp %21 : vector<256x96xf32>
    %cst_27 = arith.constant 1.000000e+00 : f32
    %23 = vector.broadcast %cst_27 : f32 to vector<256x96xf32>
    %24 = arith.addf %23, %22 : vector<256x96xf32>
    %25 = arith.divf %23, %24 : vector<256x96xf32>
    %26 = vector.extract_strided_slice %19 {offsets = [0, 96], sizes = [256, 32], strides = [1, 1]} : vector<256x128xf32> to vector<256x32xf32>
    %27 = math.tanh %26 : vector<256x32xf32>
    %28 = vector.extract_strided_slice %25 {offsets = [0, 0], sizes = [256, 32], strides = [1, 1]} : vector<256x96xf32> to vector<256x32xf32>
    %29 = vector.extract_strided_slice %25 {offsets = [0, 32], sizes = [256, 32], strides = [1, 1]} : vector<256x96xf32> to vector<256x32xf32>
    %30 = vector.extract_strided_slice %25 {offsets = [0, 64], sizes = [256, 32], strides = [1, 1]} : vector<256x96xf32> to vector<256x32xf32>
    %c0_28 = arith.constant 0 : index
    %c0_29 = arith.constant 0 : index
    %31 = vector.load %arg6[%c0_28, %c0_29] : memref<256x32xf32, #tpu.memory_space<vmem>>, vector<256x32xf32>
    %32 = arith.mulf %29, %31 : vector<256x32xf32>
    %33 = arith.mulf %28, %27 : vector<256x32xf32>
    %34 = arith.addf %32, %33 : vector<256x32xf32>
    %35 = math.tanh %34 : vector<256x32xf32>
    %36 = arith.mulf %30, %35 : vector<256x32xf32>
    %c0_30 = arith.constant 0 : index
    %c0_31 = arith.constant 0 : index
    %37 = vector.load %arg6[%c0_30, %c0_31] : memref<256x32xf32, #tpu.memory_space<vmem>>, vector<256x32xf32>
    tpu.vector_store %arg6[%c0_30, %c0_31], %34 {strides = array<i32>} : memref<256x32xf32, #tpu.memory_space<vmem>>, vector<256x32xf32>,
    %38 = vector.shape_cast %36 : vector<256x32xf32> to vector<16x16x32xf32>
    %c1_32 = arith.constant 1 : index
    %c8_33 = arith.constant 8 : index
    %c0_34 = arith.constant 0 : index
    %39 = vector.load %arg5[%c1_32, %c8_33, %c0_34] : memref<18x32x32xf32, #tpu.memory_space<vmem>>, vector<16x16x32xf32>
    tpu.vector_store %arg5[%c1_32, %c8_33, %c0_34], %38 {strides = array<i32>} : memref<18x32x32xf32, #tpu.memory_space<vmem>>, vector<16x16x32xf32>,
    %c0_35 = arith.constant 0 : index
    %c0_36 = arith.constant 0 : index
    %c0_37 = arith.constant 0 : index
    %40 = vector.load %arg4[%c0_35, %c0_36, %c0_37] : memref<1x256x32xf32, #tpu.memory_space<vmem>>, vector<1x256x32xf32>
    %41 = vector.shape_cast %40 : vector<1x256x32xf32> to vector<256x32xf32>
    %42 = vector.shape_cast %36 : vector<256x32xf32> to vector<1x256x32xf32>
    tpu.vector_store %arg4[%c0_35, %c0_36, %c0_37], %42 {strides = array<i32>} : memref<1x256x32xf32, #tpu.memory_space<vmem>>, vector<1x256x32xf32>,
    return
  }
  func.func @transform_0(%arg0: i32, %arg1: i32) -> (i32, i32, i32) {
    %c8_i32 = arith.constant 8 : i32
    %0 = arith.muli %arg0, %c8_i32 : i32
    %1 = arith.addi %0, %arg1 : i32
    %c0_i32 = arith.constant 0 : i32
    %c0_i32_0 = arith.constant 0 : i32
    %c0_i32_1 = arith.constant 0 : i32
    return %1, %c0_i32, %c0_i32_0 : i32, i32, i32
  }
  func.func @transform_1(%arg0: i32, %arg1: i32) -> (i32, i32) {
    %c0_i32 = arith.constant 0 : i32
    %c0_i32_0 = arith.constant 0 : i32
    %c0_i32_1 = arith.constant 0 : i32
    return %c0_i32, %c0_i32_0 : i32, i32
  }
  func.func @transform_2(%arg0: i32, %arg1: i32) -> (i32, i32, i32) {
    %c8_i32 = arith.constant 8 : i32
    %0 = arith.muli %arg0, %c8_i32 : i32
    %1 = arith.addi %0, %arg1 : i32
    %c0_i32 = arith.constant 0 : i32
    %c0_i32_0 = arith.constant 0 : i32
    %c0_i32_1 = arith.constant 0 : i32
    return %1, %c0_i32, %c0_i32_0 : i32, i32, i32
  }
}

</mosaic_0001>

<llo_original>
// kernel: conv_lstm_forward.1
$region0: #{conv_lstm_forward.1}
  #allocation0 [shape = 'u32[]', space=smem, size = 0x4, offset = 0x4, fixed_abs, tag = 'smem constant byte address 0x4 - core index']
  #allocation1 [shape = 'u32[144,128]{1,0:T(1,128)}', space=vmem, size = 0x12000, scoped, tag = 'internal scratch']
  #allocation2 [shape = 'f32[18,32,32]{2,1,0:T(8,128)}', space=vmem, size = 0x48000, scoped, tag = 'scratch operand']
  #allocation3 [shape = 'f32[256,32]{1,0:T(8,128)}', space=vmem, size = 0x20000, scoped, tag = 'scratch operand']
  %s0 = inlined_call_operand.vmem [shape: f32[16,256,128], index: 0, kind: input, shape index: {}]
  %s1 = inlined_call_operand.vmem [shape: bf16[288,128], index: 1, kind: input, shape index: {}]
  %s2 = inlined_call_operand.hbm [shape: f32[16,256,32], index: 2, kind: output, shape index: {}]
  %s3 = sld [smem:[#allocation0]]
  $region45: #{conv_lstm_forward.1} parent=0
    _
  %s5 = ssub.s32 1, %s3
  %s6 = scalar_select 0, %s5, %s3
  $region1: #{conv_lstm_forward.1} parent=0
    #allocation4 [shape = 'u8[262144]{0}', space=vmem, size = 0x40000, scoped, tag = 'output window, operand 0']
    #allocation5 [shape = 's32[2]{0}', space=sflag, size = 0x8, scoped, tag = 'scoped memory for conv_lstm_forward.1']
    %7 = vsyncpa [#allocation5], 0
    %s8 = scalar_lea.sflag [#allocation5], 1
    %9 = vsyncpa %s8, 0
    loop: start=0, step=1, limit=18
    $region2: #{conv_lstm_forward.1} parent=1 // loop_pre_header
      _
    $region3: #{conv_lstm_forward.1} parent=1 // loop_header
      %s11 = sphi 0, %s15
      %p12 = scmp.ge.s32.totalorder %s11, 18
      %s18 = sphi 0, %s30
      %s19 = sphi 0, %s26
      %s20 = sphi 0, %s18
      %s21 = sphi 0, %s19
      %s22 = sphi 0, %s20
      %s23 = sphi 0, %s21
      %s37 = sphi 0, %s39
      %s40 = sphi 0, %s37
      %s41 = sphi 0, %s40
      %s57 = sphi 0, %s41
      %s61 = sphi 0, %s61
      %s63 = sphi 0, %s61
      %s64 = sphi 0, %s63
      %s78 = sphi 0, %s64
      %s88 = sphi 0, %s90
      %s91 = sphi 0, %s88
      %s92 = sphi 0, %s91
      %s108 = sphi 0, %s92
    $region4: #{conv_lstm_forward.1} parent=1 // loop_header_branch
      %14 = sbr.rel (%p12) target = $region8
    $region5: #{conv_lstm_forward.1} parent=1 // loop_body
      %s16 = ssub.s32 %s11, 1
      %s17 = ssub.s32 %s11, 2
      %s24 = sadd.s32 1, %s19
      %p25 = scmp.ge.s32.totalorder %s24, 8
      %s26 = scalar_select %p25, 0, %s24
      %s27 = sadd.s32 1, %s18
      %s28 = scalar_select %p25, %s27, %s18
      %p29 = scmp.ge.s32.totalorder %s28, 2
      %s30 = scalar_select %p29, 0, %s28
      %s31 = smul.u32 %s18, 8
      %s32 = sadd.s32 %s31, %s19
      %s33 = smul.u32 %s30, 8
      %s34 = sadd.s32 %s33, %s26
      %s35 = ssub.s32 %s32, %s34
      %p36 = scmp.eq.s32.totalorder %s35, 0
      %s38 = sadd.s32 %s37, 1
      %s39 = scalar_select %p36, %s37, %s38
      %p42 = pneg %p36
      %p43 = scmp.eq.s32.totalorder %s11, 15
      %p44 = por %p42, %p43
      %p45 = scmp.ne.s32.totalorder %s37, %s40
      %p46 = scmp.eq.s32.totalorder %s11, 0
      %p47 = por %p45, %p46
      %p48 = scmp.ne.s32.totalorder %s37, %s40
      %p49 = scmp.eq.s32.totalorder %s16, 15
      %p50 = por %p48, %p49
      %p51 = scmp.ne.s32.totalorder %s40, %s41
      %p52 = scmp.eq.s32.totalorder %s16, 0
      %p53 = por %p51, %p52
      %p54 = scmp.ne.s32.totalorder %s40, %s41
      %p55 = scmp.eq.s32.totalorder %s17, 15
      %p56 = por %p54, %p55
      %p58 = scmp.ne.s32.totalorder %s41, %s57
      %p59 = scmp.eq.s32.totalorder %s17, 0
      %p60 = por %p58, %p59
      %s62 = sadd.s32 %s61, 1
      %p65 = scmp.eq.s32.totalorder %s11, 15
      %p66 = scmp.ne.s32.totalorder %s61, %s63
      %p67 = scmp.eq.s32.totalorder %s11, 0
      %p68 = por %p66, %p67
      %p69 = scmp.ne.s32.totalorder %s61, %s63
      %p70 = scmp.eq.s32.totalorder %s16, 15
      %p71 = por %p69, %p70
      %p72 = scmp.ne.s32.totalorder %s63, %s64
      %p73 = scmp.eq.s32.totalorder %s16, 0
      %p74 = por %p72, %p73
      %p75 = scmp.ne.s32.totalorder %s63, %s64
      %p76 = scmp.eq.s32.totalorder %s17, 15
      %p77 = por %p75, %p76
      %p79 = scmp.ne.s32.totalorder %s64, %s78
      %p80 = scmp.eq.s32.totalorder %s17, 0
      %p81 = por %p79, %p80
      %s82 = smul.u32 %s18, 8
      %s83 = sadd.s32 %s82, %s19
      %s84 = smul.u32 %s30, 8
      %s85 = sadd.s32 %s84, %s26
      %s86 = ssub.s32 %s83, %s85
      %p87 = scmp.eq.s32.totalorder %s86, 0
      %s89 = sadd.s32 %s88, 1
      %s90 = scalar_select %p87, %s88, %s89
      %p93 = pneg %p87
      %p94 = scmp.eq.s32.totalorder %s11, 15
      %p95 = por %p93, %p94
      %p96 = scmp.ne.s32.totalorder %s88, %s91
      %p97 = scmp.eq.s32.totalorder %s11, 0
      %p98 = por %p96, %p97
      %p99 = scmp.ne.s32.totalorder %s88, %s91
      %p100 = scmp.eq.s32.totalorder %s16, 15
      %p101 = por %p99, %p100
      %p102 = scmp.ne.s32.totalorder %s91, %s92
      %p103 = scmp.eq.s32.totalorder %s16, 0
      %p104 = por %p102, %p103
      %p105 = scmp.ne.s32.totalorder %s91, %s92
      %p106 = scmp.eq.s32.totalorder %s17, 15
      %p107 = por %p105, %p106
      %p109 = scmp.ne.s32.totalorder %s92, %s108
      %p110 = scmp.eq.s32.totalorder %s17, 0
      %p111 = por %p109, %p110
      %p112 = scmp.le.s32.totalorder 1, %s11
      %p113 = scmp.lt.s32.totalorder %s11, 17
      %p114 = pnand %p112, %p113
      %p115 = pneg %p114
      // Predicated region
      $region9: #{conv_lstm_forward.1} parent=5 // pred_check
        _
      $region10: #{conv_lstm_forward.1} parent=5 // pred_check_branch
        %117 = sbr.rel (%p114) target = $region12
      $region11: #{conv_lstm_forward.1} parent=5 // pred_region
        %s118 = ssub.s32 %s11, 1
        // Predicated region
        $region13: #{conv_lstm_forward.1} parent=11 // pred_check
          %p119 = pneg %p74
        $region14: #{conv_lstm_forward.1} parent=11 // pred_check_branch
          %121 = sbr.rel (%p119) target = $region16
        $region15: #{conv_lstm_forward.1} parent=11 // pred_region
          _
        $region16: #{conv_lstm_forward.1} parent=11 // pred_fallthru
          _
      $region12: #{conv_lstm_forward.1} parent=5 // pred_fallthru
        _
      %p122 = scmp.lt.s32.totalorder %s11, 16
      // Predicated region
      $region17: #{conv_lstm_forward.1} parent=5 // pred_check
        %p123 = pneg %p122
      $region18: #{conv_lstm_forward.1} parent=5 // pred_check_branch
        %125 = sbr.rel (%p123) target = $region20
      $region19: #{conv_lstm_forward.1} parent=5 // pred_region
        // Predicated region
        $region21: #{conv_lstm_forward.1} parent=19 // pred_check
          %p126 = pneg %p47
        $region22: #{conv_lstm_forward.1} parent=19 // pred_check_branch
          %128 = sbr.rel (%p126) target = $region24
        $region23: #{conv_lstm_forward.1} parent=19 // pred_region
          %s129 = smul.u32 %s18, 8
          %s130 = sadd.s32 %s129, %s19
          %p131 = scmp.lt.s32.totalorder %s130, 15
          %s132 = scalar_select %p131, %s130, 15
          %s133 = smul.addr %s132, 32
          %s134 = smul.addr %s133, 8
          %s135 = scalar_lea.vmem %s0, %s134
          %s136 = smul.u32 %s18, 8
          %s137 = sadd.s32 %s136, %s19
        $region24: #{conv_lstm_forward.1} parent=19 // pred_fallthru
          _
      $region20: #{conv_lstm_forward.1} parent=5 // pred_fallthru
        _
      %p138 = scmp.le.s32.totalorder 1, %s11
      %p139 = scmp.lt.s32.totalorder %s11, 17
      %p140 = pnand %p138, %p139
      %p141 = pneg %p140
      // Predicated region
      $region25: #{conv_lstm_forward.1} parent=5 // pred_check
        _
      $region26: #{conv_lstm_forward.1} parent=5 // pred_check_branch
        %143 = sbr.rel (%p140) target = $region28
      $region27: #{conv_lstm_forward.1} parent=5 // pred_region
        %s144 = ssub.s32 %s11, 1
        %s145 = smul.u32 %s20, 8
        %s146 = sadd.s32 %s145, %s21
        %p147 = scmp.lt.s32.totalorder %s146, 15
        %s148 = scalar_select %p147, %s146, 15
        %s149 = smul.addr %s148, 32
        %s150 = smul.addr %s149, 8
        %s151 = scalar_lea.vmem %s0, %s150
        %p152 = pneg %p53
        %p153 = pneg %p50
        %p154 = pneg %p74
        %p155 = pneg %p71
        %p156 = pneg %p104
        %p157 = pneg %p101
        %s158 = sand.u32 %s91, 1
        %s159 = scalar_lea.sflag [#allocation5], %s158
        %s160 = sand.u32 %s91, 1
        %s161 = smul.addr %s160, 256
        %s162 = scalar_lea.vmem [#allocation4], %s161
        %s163 = smul.u32 %s20, 8
        %s164 = sadd.s32 %s163, %s21
        %p165 = scmp.lt.s32.totalorder %s164, 15
        %s166 = scalar_select %p165, %s164, 15
        %s167 = smul.addr %s166, 32
        %s168 = smul.addr %s167, 8
        %s169 = scalar_lea.vmem %s0, %s168
        %s170 = smul.u32 %s20, 8
        %s171 = sadd.s32 %s170, %s21
        %s172 = smul.u32 %s20, 8
        %s173 = sadd.s32 %s172, %s21
        %p175 = scmp.eq.s32.totalorder %s21, 0
        // Predicated region
        $region29: #{conv_lstm_forward.1} parent=27 // pred_check
          %p176 = pneg %p175
        $region30: #{conv_lstm_forward.1} parent=27 // pred_check_branch
          %178 = sbr.rel (%p176) target = $region32
        $region31: #{conv_lstm_forward.1} parent=27 // pred_region
          %vm179 = vcmask 261120
          %180 = vst.msk [vmem:[#allocation2] sm:$0xff] %vm179, 0.0
          %181 = vst.msk [vmem:[#allocation2 + $0x8] sm:$0xff] %vm179, 0.0
          %182 = vst.msk [vmem:[#allocation2 + $0x10] sm:$0xff] %vm179, 0.0
          %183 = vst.msk [vmem:[#allocation2 + $0x18] sm:$0xff] %vm179, 0.0
          %184 = vst.msk [vmem:[#allocation2 + $0x20] sm:$0xff] %vm179, 0.0
          %185 = vst.msk [vmem:[#allocation2 + $0x28] sm:$0xff] %vm179, 0.0
          %186 = vst.msk [vmem:[#allocation2 + $0x30] sm:$0xff] %vm179, 0.0
          %187 = vst.msk [vmem:[#allocation2 + $0x38] sm:$0xff] %vm179, 0.0
          %188 = vst.msk [vmem:[#allocation2 + $0x40] sm:$0xff] %vm179, 0.0
          %189 = vst.msk [vmem:[#allocation2 + $0x48] sm:$0xff] %vm179, 0.0
          %190 = vst.msk [vmem:[#allocation2 + $0x50] sm:$0xff] %vm179, 0.0
          %191 = vst.msk [vmem:[#allocation2 + $0x58] sm:$0xff] %vm179, 0.0
          %192 = vst.msk [vmem:[#allocation2 + $0x60] sm:$0xff] %vm179, 0.0
          %193 = vst.msk [vmem:[#allocation2 + $0x68] sm:$0xff] %vm179, 0.0
          %194 = vst.msk [vmem:[#allocation2 + $0x70] sm:$0xff] %vm179, 0.0
          %195 = vst.msk [vmem:[#allocation2 + $0x78] sm:$0xff] %vm179, 0.0
          %196 = vst.msk [vmem:[#allocation2 + $0x80] sm:$0xff] %vm179, 0.0
          %197 = vst.msk [vmem:[#allocation2 + $0x88] sm:$0xff] %vm179, 0.0
          %198 = vst.msk [vmem:[#allocation2 + $0x90] sm:$0xff] %vm179, 0.0
          %199 = vst.msk [vmem:[#allocation2 + $0x98] sm:$0xff] %vm179, 0.0
          %200 = vst.msk [vmem:[#allocation2 + $0xa0] sm:$0xff] %vm179, 0.0
          %201 = vst.msk [vmem:[#allocation2 + $0xa8] sm:$0xff] %vm179, 0.0
          %202 = vst.msk [vmem:[#allocation2 + $0xb0] sm:$0xff] %vm179, 0.0
          %203 = vst.msk [vmem:[#allocation2 + $0xb8] sm:$0xff] %vm179, 0.0
          %204 = vst.msk [vmem:[#allocation2 + $0xc0] sm:$0xff] %vm179, 0.0
          %205 = vst.msk [vmem:[#allocation2 + $0xc8] sm:$0xff] %vm179, 0.0
          %206 = vst.msk [vmem:[#allocation2 + $0xd0] sm:$0xff] %vm179, 0.0
          %207 = vst.msk [vmem:[#allocation2 + $0xd8] sm:$0xff] %vm179, 0.0
          %208 = vst.msk [vmem:[#allocation2 + $0xe0] sm:$0xff] %vm179, 0.0
          %209 = vst.msk [vmem:[#allocation2 + $0xe8] sm:$0xff] %vm179, 0.0
          %210 = vst.msk [vmem:[#allocation2 + $0xf0] sm:$0xff] %vm179, 0.0
          %211 = vst.msk [vmem:[#allocation2 + $0xf8] sm:$0xff] %vm179, 0.0
          %212 = vst.msk [vmem:[#allocation2 + $0x100] sm:$0xff] %vm179, 0.0
          %213 = vst.msk [vmem:[#allocation2 + $0x108] sm:$0xff] %vm179, 0.0
          %214 = vst.msk [vmem:[#allocation2 + $0x110] sm:$0xff] %vm179, 0.0
          %215 = vst.msk [vmem:[#allocation2 + $0x118] sm:$0xff] %vm179, 0.0
          %216 = vst.msk [vmem:[#allocation2 + $0x120] sm:$0xff] %vm179, 0.0
          %217 = vst.msk [vmem:[#allocation2 + $0x128] sm:$0xff] %vm179, 0.0
          %218 = vst.msk [vmem:[#allocation2 + $0x130] sm:$0xff] %vm179, 0.0
          %219 = vst.msk [vmem:[#allocation2 + $0x138] sm:$0xff] %vm179, 0.0
          %220 = vst.msk [vmem:[#allocation2 + $0x140] sm:$0xff] %vm179, 0.0
          %221 = vst.msk [vmem:[#allocation2 + $0x148] sm:$0xff] %vm179, 0.0
          %222 = vst.msk [vmem:[#allocation2 + $0x150] sm:$0xff] %vm179, 0.0
          %223 = vst.msk [vmem:[#allocation2 + $0x158] sm:$0xff] %vm179, 0.0
          %224 = vst.msk [vmem:[#allocation2 + $0x160] sm:$0xff] %vm179, 0.0
          %225 = vst.msk [vmem:[#allocation2 + $0x168] sm:$0xff] %vm179, 0.0
          %226 = vst.msk [vmem:[#allocation2 + $0x170] sm:$0xff] %vm179, 0.0
          %227 = vst.msk [vmem:[#allocation2 + $0x178] sm:$0xff] %vm179, 0.0
          %228 = vst.msk [vmem:[#allocation2 + $0x180] sm:$0xff] %vm179, 0.0
          %229 = vst.msk [vmem:[#allocation2 + $0x188] sm:$0xff] %vm179, 0.0
          %230 = vst.msk [vmem:[#allocation2 + $0x190] sm:$0xff] %vm179, 0.0
          %231 = vst.msk [vmem:[#allocation2 + $0x198] sm:$0xff] %vm179, 0.0
          %232 = vst.msk [vmem:[#allocation2 + $0x1a0] sm:$0xff] %vm179, 0.0
          %233 = vst.msk [vmem:[#allocation2 + $0x1a8] sm:$0xff] %vm179, 0.0
          %234 = vst.msk [vmem:[#allocation2 + $0x1b0] sm:$0xff] %vm179, 0.0
          %235 = vst.msk [vmem:[#allocation2 + $0x1b8] sm:$0xff] %vm179, 0.0
          %236 = vst.msk [vmem:[#allocation2 + $0x1c0] sm:$0xff] %vm179, 0.0
          %237 = vst.msk [vmem:[#allocation2 + $0x1c8] sm:$0xff] %vm179, 0.0
          %238 = vst.msk [vmem:[#allocation2 + $0x1d0] sm:$0xff] %vm179, 0.0
          %239 = vst.msk [vmem:[#allocation2 + $0x1d8] sm:$0xff] %vm179, 0.0
          %240 = vst.msk [vmem:[#allocation2 + $0x1e0] sm:$0xff] %vm179, 0.0
          %241 = vst.msk [vmem:[#allocation2 + $0x1e8] sm:$0xff] %vm179, 0.0
          %242 = vst.msk [vmem:[#allocation2 + $0x1f0] sm:$0xff] %vm179, 0.0
          %243 = vst.msk [vmem:[#allocation2 + $0x1f8] sm:$0xff] %vm179, 0.0
          %244 = vst.msk [vmem:[#allocation2 + $0x200] sm:$0xff] %vm179, 0.0
          %245 = vst.msk [vmem:[#allocation2 + $0x208] sm:$0xff] %vm179, 0.0
          %246 = vst.msk [vmem:[#allocation2 + $0x210] sm:$0xff] %vm179, 0.0
          %247 = vst.msk [vmem:[#allocation2 + $0x218] sm:$0xff] %vm179, 0.0
          %248 = vst.msk [vmem:[#allocation2 + $0x220] sm:$0xff] %vm179, 0.0
          %249 = vst.msk [vmem:[#allocation2 + $0x228] sm:$0xff] %vm179, 0.0
          %250 = vst.msk [vmem:[#allocation2 + $0x230] sm:$0xff] %vm179, 0.0
          %251 = vst.msk [vmem:[#allocation2 + $0x238] sm:$0xff] %vm179, 0.0
          %252 = vst.msk [vmem:[#allocation3] sm:$0xff] %vm179, 0.0
          %253 = vst.msk [vmem:[#allocation3 + $0x8] sm:$0xff] %vm179, 0.0
          %254 = vst.msk [vmem:[#allocation3 + $0x10] sm:$0xff] %vm179, 0.0
          %255 = vst.msk [vmem:[#allocation3 + $0x18] sm:$0xff] %vm179, 0.0
          %256 = vst.msk [vmem:[#allocation3 + $0x20] sm:$0xff] %vm179, 0.0
          %257 = vst.msk [vmem:[#allocation3 + $0x28] sm:$0xff] %vm179, 0.0
          %258 = vst.msk [vmem:[#allocation3 + $0x30] sm:$0xff] %vm179, 0.0
          %259 = vst.msk [vmem:[#allocation3 + $0x38] sm:$0xff] %vm179, 0.0
          %260 = vst.msk [vmem:[#allocation3 + $0x40] sm:$0xff] %vm179, 0.0
          %261 = vst.msk [vmem:[#allocation3 + $0x48] sm:$0xff] %vm179, 0.0
          %262 = vst.msk [vmem:[#allocation3 + $0x50] sm:$0xff] %vm179, 0.0
          %263 = vst.msk [vmem:[#allocation3 + $0x58] sm:$0xff] %vm179, 0.0
          %264 = vst.msk [vmem:[#allocation3 + $0x60] sm:$0xff] %vm179, 0.0
          %265 = vst.msk [vmem:[#allocation3 + $0x68] sm:$0xff] %vm179, 0.0
          %266 = vst.msk [vmem:[#allocation3 + $0x70] sm:$0xff] %vm179, 0.0
          %267 = vst.msk [vmem:[#allocation3 + $0x78] sm:$0xff] %vm179, 0.0
          %268 = vst.msk [vmem:[#allocation3 + $0x80] sm:$0xff] %vm179, 0.0
          %269 = vst.msk [vmem:[#allocation3 + $0x88] sm:$0xff] %vm179, 0.0
          %270 = vst.msk [vmem:[#allocation3 + $0x90] sm:$0xff] %vm179, 0.0
          %271 = vst.msk [vmem:[#allocation3 + $0x98] sm:$0xff] %vm179, 0.0
          %272 = vst.msk [vmem:[#allocation3 + $0xa0] sm:$0xff] %vm179, 0.0
          %273 = vst.msk [vmem:[#allocation3 + $0xa8] sm:$0xff] %vm179, 0.0
          %274 = vst.msk [vmem:[#allocation3 + $0xb0] sm:$0xff] %vm179, 0.0
          %275 = vst.msk [vmem:[#allocation3 + $0xb8] sm:$0xff] %vm179, 0.0
          %276 = vst.msk [vmem:[#allocation3 + $0xc0] sm:$0xff] %vm179, 0.0
          %277 = vst.msk [vmem:[#allocation3 + $0xc8] sm:$0xff] %vm179, 0.0
          %278 = vst.msk [vmem:[#allocation3 + $0xd0] sm:$0xff] %vm179, 0.0
          %279 = vst.msk [vmem:[#allocation3 + $0xd8] sm:$0xff] %vm179, 0.0
          %280 = vst.msk [vmem:[#allocation3 + $0xe0] sm:$0xff] %vm179, 0.0
          %281 = vst.msk [vmem:[#allocation3 + $0xe8] sm:$0xff] %vm179, 0.0
          %282 = vst.msk [vmem:[#allocation3 + $0xf0] sm:$0xff] %vm179, 0.0
          %283 = vst.msk [vmem:[#allocation3 + $0xf8] sm:$0xff] %vm179, 0.0
        $region32: #{conv_lstm_forward.1} parent=27 // pred_fallthru
          _
        %v284 = vld [vmem:[#allocation2 + $0x7] sm:$0xff]
        %v285 = vld [vmem:[#allocation2 + $0xf] sm:$0xff]
        %v286 = vld [vmem:[#allocation2 + $0x27] sm:$0xff]
        %v287 = vld [vmem:[#allocation2 + $0x2f] sm:$0xff]
        %v288 = vld [vmem:[#allocation2 + $0x47] sm:$0xff]
        %v289 = vld [vmem:[#allocation2 + $0x4f] sm:$0xff]
        %v290 = vld [vmem:[#allocation2 + $0x67] sm:$0xff]
        %v291 = vld [vmem:[#allocation2 + $0x6f] sm:$0xff]
        %v292 = vld [vmem:[#allocation2 + $0x87] sm:$0xff]
        %v293 = vld [vmem:[#allocation2 + $0x8f] sm:$0xff]
        %v294 = vld [vmem:[#allocation2 + $0xa7] sm:$0xff]
        %v295 = vld [vmem:[#allocation2 + $0xaf] sm:$0xff]
        %v296 = vld [vmem:[#allocation2 + $0xc7] sm:$0xff]
        %v297 = vld [vmem:[#allocation2 + $0xcf] sm:$0xff]
        %v298 = vld [vmem:[#allocation2 + $0xe7] sm:$0xff]
        %v299 = vld [vmem:[#allocation2 + $0xef] sm:$0xff]
        %v300 = vld [vmem:[#allocation2 + $0x107] sm:$0xff]
        %v301 = vld [vmem:[#allocation2 + $0x10f] sm:$0xff]
        %v302 = vld [vmem:[#allocation2 + $0x127] sm:$0xff]
        %v303 = vld [vmem:[#allocation2 + $0x12f] sm:$0xff]
        %v304 = vld [vmem:[#allocation2 + $0x147] sm:$0xff]
        %v305 = vld [vmem:[#allocation2 + $0x14f] sm:$0xff]
        %v306 = vld [vmem:[#allocation2 + $0x167] sm:$0xff]
        %v307 = vld [vmem:[#allocation2 + $0x16f] sm:$0xff]
        %v308 = vld [vmem:[#allocation2 + $0x187] sm:$0xff]
        %v309 = vld [vmem:[#allocation2 + $0x18f] sm:$0xff]
        %v310 = vld [vmem:[#allocation2 + $0x1a7] sm:$0xff]
        %v311 = vld [vmem:[#allocation2 + $0x1af] sm:$0xff]
        %v312 = vld [vmem:[#allocation2 + $0x1c7] sm:$0xff]
        %v313 = vld [vmem:[#allocation2 + $0x1cf] sm:$0xff]
        %v314 = vld [vmem:[#allocation2 + $0x1e7] sm:$0xff]
        %v315 = vld [vmem:[#allocation2 + $0x1ef] sm:$0xff]
        %v316 = vld [vmem:[#allocation2 + $0x8] sm:$0xff]
        %v317 = vld [vmem:[#allocation2 + $0x10] sm:$0xff]
        %v318 = vld [vmem:[#allocation2 + $0x28] sm:$0xff]
        %v319 = vld [vmem:[#allocation2 + $0x30] sm:$0xff]
        %v320 = vld [vmem:[#allocation2 + $0x48] sm:$0xff]
        %v321 = vld [vmem:[#allocation2 + $0x50] sm:$0xff]
        %v322 = vld [vmem:[#allocation2 + $0x68] sm:$0xff]
        %v323 = vld [vmem:[#allocation2 + $0x70] sm:$0xff]
        %v324 = vld [vmem:[#allocation2 + $0x88] sm:$0xff]
        %v325 = vld [vmem:[#allocation2 + $0x90] sm:$0xff]
        %v326 = vld [vmem:[#allocation2 + $0xa8] sm:$0xff]
        %v327 = vld [vmem:[#allocation2 + $0xb0] sm:$0xff]
        %v328 = vld [vmem:[#allocation2 + $0xc8] sm:$0xff]
        %v329 = vld [vmem:[#allocation2 + $0xd0] sm:$0xff]
        %v330 = vld [vmem:[#allocation2 + $0xe8] sm:$0xff]
        %v331 = vld [vmem:[#allocation2 + $0xf0] sm:$0xff]
        %v332 = vld [vmem:[#allocation2 + $0x108] sm:$0xff]
        %v333 = vld [vmem:[#allocation2 + $0x110] sm:$0xff]
        %v334 = vld [vmem:[#allocation2 + $0x128] sm:$0xff]
        %v335 = vld [vmem:[#allocation2 + $0x130] sm:$0xff]
        %v336 = vld [vmem:[#allocation2 + $0x148] sm:$0xff]
        %v337 = vld [vmem:[#allocation2 + $0x150] sm:$0xff]
        %v338 = vld [vmem:[#allocation2 + $0x168] sm:$0xff]
        %v339 = vld [vmem:[#allocation2 + $0x170] sm:$0xff]
        %v340 = vld [vmem:[#allocation2 + $0x188] sm:$0xff]
        %v341 = vld [vmem:[#allocation2 + $0x190] sm:$0xff]
        %v342 = vld [vmem:[#allocation2 + $0x1a8] sm:$0xff]
        %v343 = vld [vmem:[#allocation2 + $0x1b0] sm:$0xff]
        %v344 = vld [vmem:[#allocation2 + $0x1c8] sm:$0xff]
        %v345 = vld [vmem:[#allocation2 + $0x1d0] sm:$0xff]
        %v346 = vld [vmem:[#allocation2 + $0x1e8] sm:$0xff]
        %v347 = vld [vmem:[#allocation2 + $0x1f0] sm:$0xff]
        %v348 = vld [vmem:[#allocation2 + $0x9] sm:$0xff]
        %v349 = vld [vmem:[#allocation2 + $0x11] sm:$0xff]
        %v350 = vld [vmem:[#allocation2 + $0x29] sm:$0xff]
        %v351 = vld [vmem:[#allocation2 + $0x31] sm:$0xff]
        %v352 = vld [vmem:[#allocation2 + $0x49] sm:$0xff]
        %v353 = vld [vmem:[#allocation2 + $0x51] sm:$0xff]
        %v354 = vld [vmem:[#allocation2 + $0x69] sm:$0xff]
        %v355 = vld [vmem:[#allocation2 + $0x71] sm:$0xff]
        %v356 = vld [vmem:[#allocation2 + $0x89] sm:$0xff]
        %v357 = vld [vmem:[#allocation2 + $0x91] sm:$0xff]
        %v358 = vld [vmem:[#allocation2 + $0xa9] sm:$0xff]
        %v359 = vld [vmem:[#allocation2 + $0xb1] sm:$0xff]
        %v360 = vld [vmem:[#allocation2 + $0xc9] sm:$0xff]
        %v361 = vld [vmem:[#allocation2 + $0xd1] sm:$0xff]
        %v362 = vld [vmem:[#allocation2 + $0xe9] sm:$0xff]
        %v363 = vld [vmem:[#allocation2 + $0xf1] sm:$0xff]
        %v364 = vld [vmem:[#allocation2 + $0x109] sm:$0xff]
        %v365 = vld [vmem:[#allocation2 + $0x111] sm:$0xff]
        %v366 = vld [vmem:[#allocation2 + $0x129] sm:$0xff]
        %v367 = vld [vmem:[#allocation2 + $0x131] sm:$0xff]
        %v368 = vld [vmem:[#allocation2 + $0x149] sm:$0xff]
        %v369 = vld [vmem:[#allocation2 + $0x151] sm:$0xff]
        %v370 = vld [vmem:[#allocation2 + $0x169] sm:$0xff]
        %v371 = vld [vmem:[#allocation2 + $0x171] sm:$0xff]
        %v372 = vld [vmem:[#allocation2 + $0x189] sm:$0xff]
        %v373 = vld [vmem:[#allocation2 + $0x191] sm:$0xff]
        %v374 = vld [vmem:[#allocation2 + $0x1a9] sm:$0xff]
        %v375 = vld [vmem:[#allocation2 + $0x1b1] sm:$0xff]
        %v376 = vld [vmem:[#allocation2 + $0x1c9] sm:$0xff]
        %v377 = vld [vmem:[#allocation2 + $0x1d1] sm:$0xff]
        %v378 = vld [vmem:[#allocation2 + $0x1e9] sm:$0xff]
        %v379 = vld [vmem:[#allocation2 + $0x1f1] sm:$0xff]
        %s380 = scalar_lea.vmem [#allocation2], 32
        %v381 = vld [vmem:[%s380 + $0x7] sm:$0xff]
        %v382 = vld [vmem:[%s380 + $0xf] sm:$0xff]
        %v383 = vld [vmem:[%s380 + $0x27] sm:$0xff]
        %v384 = vld [vmem:[%s380 + $0x2f] sm:$0xff]
        %v385 = vld [vmem:[%s380 + $0x47] sm:$0xff]
        %v386 = vld [vmem:[%s380 + $0x4f] sm:$0xff]
        %v387 = vld [vmem:[%s380 + $0x67] sm:$0xff]
        %v388 = vld [vmem:[%s380 + $0x6f] sm:$0xff]
        %v389 = vld [vmem:[%s380 + $0x87] sm:$0xff]
        %v390 = vld [vmem:[%s380 + $0x8f] sm:$0xff]
        %v391 = vld [vmem:[%s380 + $0xa7] sm:$0xff]
        %v392 = vld [vmem:[%s380 + $0xaf] sm:$0xff]
        %v393 = vld [vmem:[%s380 + $0xc7] sm:$0xff]
        %v394 = vld [vmem:[%s380 + $0xcf] sm:$0xff]
        %v395 = vld [vmem:[%s380 + $0xe7] sm:$0xff]
        %v396 = vld [vmem:[%s380 + $0xef] sm:$0xff]
        %v397 = vld [vmem:[%s380 + $0x107] sm:$0xff]
        %v398 = vld [vmem:[%s380 + $0x10f] sm:$0xff]
        %v399 = vld [vmem:[%s380 + $0x127] sm:$0xff]
        %v400 = vld [vmem:[%s380 + $0x12f] sm:$0xff]
        %v401 = vld [vmem:[%s380 + $0x147] sm:$0xff]
        %v402 = vld [vmem:[%s380 + $0x14f] sm:$0xff]
        %v403 = vld [vmem:[%s380 + $0x167] sm:$0xff]
        %v404 = vld [vmem:[%s380 + $0x16f] sm:$0xff]
        %v405 = vld [vmem:[%s380 + $0x187] sm:$0xff]
        %v406 = vld [vmem:[%s380 + $0x18f] sm:$0xff]
        %v407 = vld [vmem:[%s380 + $0x1a7] sm:$0xff]
        %v408 = vld [vmem:[%s380 + $0x1af] sm:$0xff]
        %v409 = vld [vmem:[%s380 + $0x1c7] sm:$0xff]
        %v410 = vld [vmem:[%s380 + $0x1cf] sm:$0xff]
        %v411 = vld [vmem:[%s380 + $0x1e7] sm:$0xff]
        %v412 = vld [vmem:[%s380 + $0x1ef] sm:$0xff]
        %v413 = vld [vmem:[%s380 + $0x8] sm:$0xff]
        %v414 = vld [vmem:[%s380 + $0x10] sm:$0xff]
        %v415 = vld [vmem:[%s380 + $0x28] sm:$0xff]
        %v416 = vld [vmem:[%s380 + $0x30] sm:$0xff]
        %v417 = vld [vmem:[%s380 + $0x48] sm:$0xff]
        %v418 = vld [vmem:[%s380 + $0x50] sm:$0xff]
        %v419 = vld [vmem:[%s380 + $0x68] sm:$0xff]
        %v420 = vld [vmem:[%s380 + $0x70] sm:$0xff]
        %v421 = vld [vmem:[%s380 + $0x88] sm:$0xff]
        %v422 = vld [vmem:[%s380 + $0x90] sm:$0xff]
        %v423 = vld [vmem:[%s380 + $0xa8] sm:$0xff]
        %v424 = vld [vmem:[%s380 + $0xb0] sm:$0xff]
        %v425 = vld [vmem:[%s380 + $0xc8] sm:$0xff]
        %v426 = vld [vmem:[%s380 + $0xd0] sm:$0xff]
        %v427 = vld [vmem:[%s380 + $0xe8] sm:$0xff]
        %v428 = vld [vmem:[%s380 + $0xf0] sm:$0xff]
        %v429 = vld [vmem:[%s380 + $0x108] sm:$0xff]
        %v430 = vld [vmem:[%s380 + $0x110] sm:$0xff]
        %v431 = vld [vmem:[%s380 + $0x128] sm:$0xff]
        %v432 = vld [vmem:[%s380 + $0x130] sm:$0xff]
        %v433 = vld [vmem:[%s380 + $0x148] sm:$0xff]
        %v434 = vld [vmem:[%s380 + $0x150] sm:$0xff]
        %v435 = vld [vmem:[%s380 + $0x168] sm:$0xff]
        %v436 = vld [vmem:[%s380 + $0x170] sm:$0xff]
        %v437 = vld [vmem:[%s380 + $0x188] sm:$0xff]
        %v438 = vld [vmem:[%s380 + $0x190] sm:$0xff]
        %v439 = vld [vmem:[%s380 + $0x1a8] sm:$0xff]
        %v440 = vld [vmem:[%s380 + $0x1b0] sm:$0xff]
        %v441 = vld [vmem:[%s380 + $0x1c8] sm:$0xff]
        %v442 = vld [vmem:[%s380 + $0x1d0] sm:$0xff]
        %v443 = vld [vmem:[%s380 + $0x1e8] sm:$0xff]
        %v444 = vld [vmem:[%s380 + $0x1f0] sm:$0xff]
        %v445 = vld [vmem:[%s380 + $0x9] sm:$0xff]
        %v446 = vld [vmem:[%s380 + $0x11] sm:$0xff]
        %v447 = vld [vmem:[%s380 + $0x29] sm:$0xff]
        %v448 = vld [vmem:[%s380 + $0x31] sm:$0xff]
        %v449 = vld [vmem:[%s380 + $0x49] sm:$0xff]
        %v450 = vld [vmem:[%s380 + $0x51] sm:$0xff]
        %v451 = vld [vmem:[%s380 + $0x69] sm:$0xff]
        %v452 = vld [vmem:[%s380 + $0x71] sm:$0xff]
        %v453 = vld [vmem:[%s380 + $0x89] sm:$0xff]
        %v454 = vld [vmem:[%s380 + $0x91] sm:$0xff]
        %v455 = vld [vmem:[%s380 + $0xa9] sm:$0xff]
        %v456 = vld [vmem:[%s380 + $0xb1] sm:$0xff]
        %v457 = vld [vmem:[%s380 + $0xc9] sm:$0xff]
        %v458 = vld [vmem:[%s380 + $0xd1] sm:$0xff]
        %v459 = vld [vmem:[%s380 + $0xe9] sm:$0xff]
        %v460 = vld [vmem:[%s380 + $0xf1] sm:$0xff]
        %v461 = vld [vmem:[%s380 + $0x109] sm:$0xff]
        %v462 = vld [vmem:[%s380 + $0x111] sm:$0xff]
        %v463 = vld [vmem:[%s380 + $0x129] sm:$0xff]
        %v464 = vld [vmem:[%s380 + $0x131] sm:$0xff]
        %v465 = vld [vmem:[%s380 + $0x149] sm:$0xff]
        %v466 = vld [vmem:[%s380 + $0x151] sm:$0xff]
        %v467 = vld [vmem:[%s380 + $0x169] sm:$0xff]
        %v468 = vld [vmem:[%s380 + $0x171] sm:$0xff]
        %v469 = vld [vmem:[%s380 + $0x189] sm:$0xff]
        %v470 = vld [vmem:[%s380 + $0x191] sm:$0xff]
        %v471 = vld [vmem:[%s380 + $0x1a9] sm:$0xff]
        %v472 = vld [vmem:[%s380 + $0x1b1] sm:$0xff]
        %v473 = vld [vmem:[%s380 + $0x1c9] sm:$0xff]
        %v474 = vld [vmem:[%s380 + $0x1d1] sm:$0xff]
        %v475 = vld [vmem:[%s380 + $0x1e9] sm:$0xff]
        %v476 = vld [vmem:[%s380 + $0x1f1] sm:$0xff]
        %s477 = scalar_lea.vmem [#allocation2], 64
        %v478 = vld [vmem:[%s477 + $0x7] sm:$0xff]
        %v479 = vld [vmem:[%s477 + $0xf] sm:$0xff]
        %v480 = vld [vmem:[%s477 + $0x27] sm:$0xff]
        %v481 = vld [vmem:[%s477 + $0x2f] sm:$0xff]
        %v482 = vld [vmem:[%s477 + $0x47] sm:$0xff]
        %v483 = vld [vmem:[%s477 + $0x4f] sm:$0xff]
        %v484 = vld [vmem:[%s477 + $0x67] sm:$0xff]
        %v485 = vld [vmem:[%s477 + $0x6f] sm:$0xff]
        %v486 = vld [vmem:[%s477 + $0x87] sm:$0xff]
        %v487 = vld [vmem:[%s477 + $0x8f] sm:$0xff]
        %v488 = vld [vmem:[%s477 + $0xa7] sm:$0xff]
        %v489 = vld [vmem:[%s477 + $0xaf] sm:$0xff]
        %v490 = vld [vmem:[%s477 + $0xc7] sm:$0xff]
        %v491 = vld [vmem:[%s477 + $0xcf] sm:$0xff]
        %v492 = vld [vmem:[%s477 + $0xe7] sm:$0xff]
        %v493 = vld [vmem:[%s477 + $0xef] sm:$0xff]
        %v494 = vld [vmem:[%s477 + $0x107] sm:$0xff]
        %v495 = vld [vmem:[%s477 + $0x10f] sm:$0xff]
        %v496 = vld [vmem:[%s477 + $0x127] sm:$0xff]
        %v497 = vld [vmem:[%s477 + $0x12f] sm:$0xff]
        %v498 = vld [vmem:[%s477 + $0x147] sm:$0xff]
        %v499 = vld [vmem:[%s477 + $0x14f] sm:$0xff]
        %v500 = vld [vmem:[%s477 + $0x167] sm:$0xff]
        %v501 = vld [vmem:[%s477 + $0x16f] sm:$0xff]
        %v502 = vld [vmem:[%s477 + $0x187] sm:$0xff]
        %v503 = vld [vmem:[%s477 + $0x18f] sm:$0xff]
        %v504 = vld [vmem:[%s477 + $0x1a7] sm:$0xff]
        %v505 = vld [vmem:[%s477 + $0x1af] sm:$0xff]
        %v506 = vld [vmem:[%s477 + $0x1c7] sm:$0xff]
        %v507 = vld [vmem:[%s477 + $0x1cf] sm:$0xff]
        %v508 = vld [vmem:[%s477 + $0x1e7] sm:$0xff]
        %v509 = vld [vmem:[%s477 + $0x1ef] sm:$0xff]
        %v510 = vld [vmem:[%s477 + $0x8] sm:$0xff]
        %v511 = vld [vmem:[%s477 + $0x10] sm:$0xff]
        %v512 = vld [vmem:[%s477 + $0x28] sm:$0xff]
        %v513 = vld [vmem:[%s477 + $0x30] sm:$0xff]
        %v514 = vld [vmem:[%s477 + $0x48] sm:$0xff]
        %v515 = vld [vmem:[%s477 + $0x50] sm:$0xff]
        %v516 = vld [vmem:[%s477 + $0x68] sm:$0xff]
        %v517 = vld [vmem:[%s477 + $0x70] sm:$0xff]
        %v518 = vld [vmem:[%s477 + $0x88] sm:$0xff]
        %v519 = vld [vmem:[%s477 + $0x90] sm:$0xff]
        %v520 = vld [vmem:[%s477 + $0xa8] sm:$0xff]
        %v521 = vld [vmem:[%s477 + $0xb0] sm:$0xff]
        %v522 = vld [vmem:[%s477 + $0xc8] sm:$0xff]
        %v523 = vld [vmem:[%s477 + $0xd0] sm:$0xff]
        %v524 = vld [vmem:[%s477 + $0xe8] sm:$0xff]
        %v525 = vld [vmem:[%s477 + $0xf0] sm:$0xff]
        %v526 = vld [vmem:[%s477 + $0x108] sm:$0xff]
        %v527 = vld [vmem:[%s477 + $0x110] sm:$0xff]
        %v528 = vld [vmem:[%s477 + $0x128] sm:$0xff]
        %v529 = vld [vmem:[%s477 + $0x130] sm:$0xff]
        %v530 = vld [vmem:[%s477 + $0x148] sm:$0xff]
        %v531 = vld [vmem:[%s477 + $0x150] sm:$0xff]
        %v532 = vld [vmem:[%s477 + $0x168] sm:$0xff]
        %v533 = vld [vmem:[%s477 + $0x170] sm:$0xff]
        %v534 = vld [vmem:[%s477 + $0x188] sm:$0xff]
        %v535 = vld [vmem:[%s477 + $0x190] sm:$0xff]
        %v536 = vld [vmem:[%s477 + $0x1a8] sm:$0xff]
        %v537 = vld [vmem:[%s477 + $0x1b0] sm:$0xff]
        %v538 = vld [vmem:[%s477 + $0x1c8] sm:$0xff]
        %v539 = vld [vmem:[%s477 + $0x1d0] sm:$0xff]
        %v540 = vld [vmem:[%s477 + $0x1e8] sm:$0xff]
        %v541 = vld [vmem:[%s477 + $0x1f0] sm:$0xff]
        %v542 = vld [vmem:[%s477 + $0x9] sm:$0xff]
        %v543 = vld [vmem:[%s477 + $0x11] sm:$0xff]
        %v544 = vld [vmem:[%s477 + $0x29] sm:$0xff]
        %v545 = vld [vmem:[%s477 + $0x31] sm:$0xff]
        %v546 = vld [vmem:[%s477 + $0x49] sm:$0xff]
        %v547 = vld [vmem:[%s477 + $0x51] sm:$0xff]
        %v548 = vld [vmem:[%s477 + $0x69] sm:$0xff]
        %v549 = vld [vmem:[%s477 + $0x71] sm:$0xff]
        %v550 = vld [vmem:[%s477 + $0x89] sm:$0xff]
        %v551 = vld [vmem:[%s477 + $0x91] sm:$0xff]
        %v552 = vld [vmem:[%s477 + $0xa9] sm:$0xff]
        %v553 = vld [vmem:[%s477 + $0xb1] sm:$0xff]
        %v554 = vld [vmem:[%s477 + $0xc9] sm:$0xff]
        %v555 = vld [vmem:[%s477 + $0xd1] sm:$0xff]
        %v556 = vld [vmem:[%s477 + $0xe9] sm:$0xff]
        %v557 = vld [vmem:[%s477 + $0xf1] sm:$0xff]
        %v558 = vld [vmem:[%s477 + $0x109] sm:$0xff]
        %v559 = vld [vmem:[%s477 + $0x111] sm:$0xff]
        %v560 = vld [vmem:[%s477 + $0x129] sm:$0xff]
        %v561 = vld [vmem:[%s477 + $0x131] sm:$0xff]
        %v562 = vld [vmem:[%s477 + $0x149] sm:$0xff]
        %v563 = vld [vmem:[%s477 + $0x151] sm:$0xff]
        %v564 = vld [vmem:[%s477 + $0x169] sm:$0xff]
        %v565 = vld [vmem:[%s477 + $0x171] sm:$0xff]
        %v566 = vld [vmem:[%s477 + $0x189] sm:$0xff]
        %v567 = vld [vmem:[%s477 + $0x191] sm:$0xff]
        %v568 = vld [vmem:[%s477 + $0x1a9] sm:$0xff]
        %v569 = vld [vmem:[%s477 + $0x1b1] sm:$0xff]
        %v570 = vld [vmem:[%s477 + $0x1c9] sm:$0xff]
        %v571 = vld [vmem:[%s477 + $0x1d1] sm:$0xff]
        %v572 = vld [vmem:[%s477 + $0x1e9] sm:$0xff]
        %v573 = vld [vmem:[%s477 + $0x1f1] sm:$0xff]
        %606 = vrot.lane.b32.xlu0 %v316, 32
        %v607 = vpop.permute.xlu0 %606
        %608 = vrot.lane.b32.xlu0 %v317, 32
        %v609 = vpop.permute.xlu0 %608
        %610 = vrot.lane.b32.xlu0 %v318, 32
        %v611 = vpop.permute.xlu0 %610
        %612 = vrot.lane.b32.xlu0 %v319, 32
        %v613 = vpop.permute.xlu0 %612
        %614 = vrot.lane.b32.xlu0 %v320, 32
        %v615 = vpop.permute.xlu0 %614
        %616 = vrot.lane.b32.xlu0 %v321, 32
        %v617 = vpop.permute.xlu0 %616
        %618 = vrot.lane.b32.xlu0 %v322, 32
        %v619 = vpop.permute.xlu0 %618
        %620 = vrot.lane.b32.xlu0 %v323, 32
        %v621 = vpop.permute.xlu0 %620
        %622 = vrot.lane.b32.xlu0 %v324, 32
        %v623 = vpop.permute.xlu0 %622
        %624 = vrot.lane.b32.xlu0 %v325, 32
        %v625 = vpop.permute.xlu0 %624
        %626 = vrot.lane.b32.xlu0 %v326, 32
        %v627 = vpop.permute.xlu0 %626
        %628 = vrot.lane.b32.xlu0 %v327, 32
        %v629 = vpop.permute.xlu0 %628
        %630 = vrot.lane.b32.xlu0 %v328, 32
        %v631 = vpop.permute.xlu0 %630
        %632 = vrot.lane.b32.xlu0 %v329, 32
        %v633 = vpop.permute.xlu0 %632
        %634 = vrot.lane.b32.xlu0 %v330, 32
        %v635 = vpop.permute.xlu0 %634
        %636 = vrot.lane.b32.xlu0 %v331, 32
        %v637 = vpop.permute.xlu0 %636
        %638 = vrot.lane.b32.xlu0 %v332, 32
        %v639 = vpop.permute.xlu0 %638
        %640 = vrot.lane.b32.xlu0 %v333, 32
        %v641 = vpop.permute.xlu0 %640
        %642 = vrot.lane.b32.xlu0 %v334, 32
        %v643 = vpop.permute.xlu0 %642
        %644 = vrot.lane.b32.xlu0 %v335, 32
        %v645 = vpop.permute.xlu0 %644
        %646 = vrot.lane.b32.xlu0 %v336, 32
        %v647 = vpop.permute.xlu0 %646
        %648 = vrot.lane.b32.xlu0 %v337, 32
        %v649 = vpop.permute.xlu0 %648
        %650 = vrot.lane.b32.xlu0 %v338, 32
        %v651 = vpop.permute.xlu0 %650
        %652 = vrot.lane.b32.xlu0 %v339, 32
        %v653 = vpop.permute.xlu0 %652
        %654 = vrot.lane.b32.xlu0 %v340, 32
        %v655 = vpop.permute.xlu0 %654
        %656 = vrot.lane.b32.xlu0 %v341, 32
        %v657 = vpop.permute.xlu0 %656
        %658 = vrot.lane.b32.xlu0 %v342, 32
        %v659 = vpop.permute.xlu0 %658
        %660 = vrot.lane.b32.xlu0 %v343, 32
        %v661 = vpop.permute.xlu0 %660
        %662 = vrot.lane.b32.xlu0 %v344, 32
        %v663 = vpop.permute.xlu0 %662
        %664 = vrot.lane.b32.xlu0 %v345, 32
        %v665 = vpop.permute.xlu0 %664
        %666 = vrot.lane.b32.xlu0 %v346, 32
        %v667 = vpop.permute.xlu0 %666
        %668 = vrot.lane.b32.xlu0 %v347, 32
        %v669 = vpop.permute.xlu0 %668
        %734 = vrot.lane.b32.xlu0 %v348, 64
        %v735 = vpop.permute.xlu0 %734
        %736 = vrot.lane.b32.xlu0 %v349, 64
        %v737 = vpop.permute.xlu0 %736
        %738 = vrot.lane.b32.xlu0 %v350, 64
        %v739 = vpop.permute.xlu0 %738
        %740 = vrot.lane.b32.xlu0 %v351, 64
        %v741 = vpop.permute.xlu0 %740
        %742 = vrot.lane.b32.xlu0 %v352, 64
        %v743 = vpop.permute.xlu0 %742
        %744 = vrot.lane.b32.xlu0 %v353, 64
        %v745 = vpop.permute.xlu0 %744
        %746 = vrot.lane.b32.xlu0 %v354, 64
        %v747 = vpop.permute.xlu0 %746
        %748 = vrot.lane.b32.xlu0 %v355, 64
        %v749 = vpop.permute.xlu0 %748
        %750 = vrot.lane.b32.xlu0 %v356, 64
        %v751 = vpop.permute.xlu0 %750
        %752 = vrot.lane.b32.xlu0 %v357, 64
        %v753 = vpop.permute.xlu0 %752
        %754 = vrot.lane.b32.xlu0 %v358, 64
        %v755 = vpop.permute.xlu0 %754
        %756 = vrot.lane.b32.xlu0 %v359, 64
        %v757 = vpop.permute.xlu0 %756
        %758 = vrot.lane.b32.xlu0 %v360, 64
        %v759 = vpop.permute.xlu0 %758
        %760 = vrot.lane.b32.xlu0 %v361, 64
        %v761 = vpop.permute.xlu0 %760
        %762 = vrot.lane.b32.xlu0 %v362, 64
        %v763 = vpop.permute.xlu0 %762
        %764 = vrot.lane.b32.xlu0 %v363, 64
        %v765 = vpop.permute.xlu0 %764
        %766 = vrot.lane.b32.xlu0 %v364, 64
        %v767 = vpop.permute.xlu0 %766
        %768 = vrot.lane.b32.xlu0 %v365, 64
        %v769 = vpop.permute.xlu0 %768
        %770 = vrot.lane.b32.xlu0 %v366, 64
        %v771 = vpop.permute.xlu0 %770
        %772 = vrot.lane.b32.xlu0 %v367, 64
        %v773 = vpop.permute.xlu0 %772
        %774 = vrot.lane.b32.xlu0 %v368, 64
        %v775 = vpop.permute.xlu0 %774
        %776 = vrot.lane.b32.xlu0 %v369, 64
        %v777 = vpop.permute.xlu0 %776
        %778 = vrot.lane.b32.xlu0 %v370, 64
        %v779 = vpop.permute.xlu0 %778
        %780 = vrot.lane.b32.xlu0 %v371, 64
        %v781 = vpop.permute.xlu0 %780
        %782 = vrot.lane.b32.xlu0 %v372, 64
        %v783 = vpop.permute.xlu0 %782
        %784 = vrot.lane.b32.xlu0 %v373, 64
        %v785 = vpop.permute.xlu0 %784
        %786 = vrot.lane.b32.xlu0 %v374, 64
        %v787 = vpop.permute.xlu0 %786
        %788 = vrot.lane.b32.xlu0 %v375, 64
        %v789 = vpop.permute.xlu0 %788
        %790 = vrot.lane.b32.xlu0 %v376, 64
        %v791 = vpop.permute.xlu0 %790
        %792 = vrot.lane.b32.xlu0 %v377, 64
        %v793 = vpop.permute.xlu0 %792
        %794 = vrot.lane.b32.xlu0 %v378, 64
        %v795 = vpop.permute.xlu0 %794
        %796 = vrot.lane.b32.xlu0 %v379, 64
        %v797 = vpop.permute.xlu0 %796
        %862 = vrot.lane.b32.xlu0 %v381, 96
        %v863 = vpop.permute.xlu0 %862
        %864 = vrot.lane.b32.xlu0 %v382, 96
        %v865 = vpop.permute.xlu0 %864
        %866 = vrot.lane.b32.xlu0 %v383, 96
        %v867 = vpop.permute.xlu0 %866
        %868 = vrot.lane.b32.xlu0 %v384, 96
        %v869 = vpop.permute.xlu0 %868
        %870 = vrot.lane.b32.xlu0 %v385, 96
        %v871 = vpop.permute.xlu0 %870
        %872 = vrot.lane.b32.xlu0 %v386, 96
        %v873 = vpop.permute.xlu0 %872
        %874 = vrot.lane.b32.xlu0 %v387, 96
        %v875 = vpop.permute.xlu0 %874
        %876 = vrot.lane.b32.xlu0 %v388, 96
        %v877 = vpop.permute.xlu0 %876
        %878 = vrot.lane.b32.xlu0 %v389, 96
        %v879 = vpop.permute.xlu0 %878
        %880 = vrot.lane.b32.xlu0 %v390, 96
        %v881 = vpop.permute.xlu0 %880
        %882 = vrot.lane.b32.xlu0 %v391, 96
        %v883 = vpop.permute.xlu0 %882
        %884 = vrot.lane.b32.xlu0 %v392, 96
        %v885 = vpop.permute.xlu0 %884
        %886 = vrot.lane.b32.xlu0 %v393, 96
        %v887 = vpop.permute.xlu0 %886
        %888 = vrot.lane.b32.xlu0 %v394, 96
        %v889 = vpop.permute.xlu0 %888
        %890 = vrot.lane.b32.xlu0 %v395, 96
        %v891 = vpop.permute.xlu0 %890
        %892 = vrot.lane.b32.xlu0 %v396, 96
        %v893 = vpop.permute.xlu0 %892
        %894 = vrot.lane.b32.xlu0 %v397, 96
        %v895 = vpop.permute.xlu0 %894
        %896 = vrot.lane.b32.xlu0 %v398, 96
        %v897 = vpop.permute.xlu0 %896
        %898 = vrot.lane.b32.xlu0 %v399, 96
        %v899 = vpop.permute.xlu0 %898
        %900 = vrot.lane.b32.xlu0 %v400, 96
        %v901 = vpop.permute.xlu0 %900
        %902 = vrot.lane.b32.xlu0 %v401, 96
        %v903 = vpop.permute.xlu0 %902
        %904 = vrot.lane.b32.xlu0 %v402, 96
        %v905 = vpop.permute.xlu0 %904
        %906 = vrot.lane.b32.xlu0 %v403, 96
        %v907 = vpop.permute.xlu0 %906
        %908 = vrot.lane.b32.xlu0 %v404, 96
        %v909 = vpop.permute.xlu0 %908
        %910 = vrot.lane.b32.xlu0 %v405, 96
        %v911 = vpop.permute.xlu0 %910
        %912 = vrot.lane.b32.xlu0 %v406, 96
        %v913 = vpop.permute.xlu0 %912
        %914 = vrot.lane.b32.xlu0 %v407, 96
        %v915 = vpop.permute.xlu0 %914
        %916 = vrot.lane.b32.xlu0 %v408, 96
        %v917 = vpop.permute.xlu0 %916
        %918 = vrot.lane.b32.xlu0 %v409, 96
        %v919 = vpop.permute.xlu0 %918
        %920 = vrot.lane.b32.xlu0 %v410, 96
        %v921 = vpop.permute.xlu0 %920
        %922 = vrot.lane.b32.xlu0 %v411, 96
        %v923 = vpop.permute.xlu0 %922
        %924 = vrot.lane.b32.xlu0 %v412, 96
        %v925 = vpop.permute.xlu0 %924
        %990 = vrot.lane.b32.xlu0 %v445, 32
        %v991 = vpop.permute.xlu0 %990
        %992 = vrot.lane.b32.xlu0 %v446, 32
        %v993 = vpop.permute.xlu0 %992
        %994 = vrot.lane.b32.xlu0 %v447, 32
        %v995 = vpop.permute.xlu0 %994
        %996 = vrot.lane.b32.xlu0 %v448, 32
        %v997 = vpop.permute.xlu0 %996
        %998 = vrot.lane.b32.xlu0 %v449, 32
        %v999 = vpop.permute.xlu0 %998
        %1000 = vrot.lane.b32.xlu0 %v450, 32
        %v1001 = vpop.permute.xlu0 %1000
        %1002 = vrot.lane.b32.xlu0 %v451, 32
        %v1003 = vpop.permute.xlu0 %1002
        %1004 = vrot.lane.b32.xlu0 %v452, 32
        %v1005 = vpop.permute.xlu0 %1004
        %1006 = vrot.lane.b32.xlu0 %v453, 32
        %v1007 = vpop.permute.xlu0 %1006
        %1008 = vrot.lane.b32.xlu0 %v454, 32
        %v1009 = vpop.permute.xlu0 %1008
        %1010 = vrot.lane.b32.xlu0 %v455, 32
        %v1011 = vpop.permute.xlu0 %1010
        %1012 = vrot.lane.b32.xlu0 %v456, 32
        %v1013 = vpop.permute.xlu0 %1012
        %1014 = vrot.lane.b32.xlu0 %v457, 32
        %v1015 = vpop.permute.xlu0 %1014
        %1016 = vrot.lane.b32.xlu0 %v458, 32
        %v1017 = vpop.permute.xlu0 %1016
        %1018 = vrot.lane.b32.xlu0 %v459, 32
        %v1019 = vpop.permute.xlu0 %1018
        %1020 = vrot.lane.b32.xlu0 %v460, 32
        %v1021 = vpop.permute.xlu0 %1020
        %1022 = vrot.lane.b32.xlu0 %v461, 32
        %v1023 = vpop.permute.xlu0 %1022
        %1024 = vrot.lane.b32.xlu0 %v462, 32
        %v1025 = vpop.permute.xlu0 %1024
        %1026 = vrot.lane.b32.xlu0 %v463, 32
        %v1027 = vpop.permute.xlu0 %1026
        %1028 = vrot.lane.b32.xlu0 %v464, 32
        %v1029 = vpop.permute.xlu0 %1028
        %1030 = vrot.lane.b32.xlu0 %v465, 32
        %v1031 = vpop.permute.xlu0 %1030
        %1032 = vrot.lane.b32.xlu0 %v466, 32
        %v1033 = vpop.permute.xlu0 %1032
        %1034 = vrot.lane.b32.xlu0 %v467, 32
        %v1035 = vpop.permute.xlu0 %1034
        %1036 = vrot.lane.b32.xlu0 %v468, 32
        %v1037 = vpop.permute.xlu0 %1036
        %1038 = vrot.lane.b32.xlu0 %v469, 32
        %v1039 = vpop.permute.xlu0 %1038
        %1040 = vrot.lane.b32.xlu0 %v470, 32
        %v1041 = vpop.permute.xlu0 %1040
        %1042 = vrot.lane.b32.xlu0 %v471, 32
        %v1043 = vpop.permute.xlu0 %1042
        %1044 = vrot.lane.b32.xlu0 %v472, 32
        %v1045 = vpop.permute.xlu0 %1044
        %1046 = vrot.lane.b32.xlu0 %v473, 32
        %v1047 = vpop.permute.xlu0 %1046
        %1048 = vrot.lane.b32.xlu0 %v474, 32
        %v1049 = vpop.permute.xlu0 %1048
        %1050 = vrot.lane.b32.xlu0 %v475, 32
        %v1051 = vpop.permute.xlu0 %1050
        %1052 = vrot.lane.b32.xlu0 %v476, 32
        %v1053 = vpop.permute.xlu0 %1052
        %1118 = vrot.lane.b32.xlu0 %v478, 64
        %v1119 = vpop.permute.xlu0 %1118
        %1120 = vrot.lane.b32.xlu0 %v479, 64
        %v1121 = vpop.permute.xlu0 %1120
        %1122 = vrot.lane.b32.xlu0 %v480, 64
        %v1123 = vpop.permute.xlu0 %1122
        %1124 = vrot.lane.b32.xlu0 %v481, 64
        %v1125 = vpop.permute.xlu0 %1124
        %1126 = vrot.lane.b32.xlu0 %v482, 64
        %v1127 = vpop.permute.xlu0 %1126
        %1128 = vrot.lane.b32.xlu0 %v483, 64
        %v1129 = vpop.permute.xlu0 %1128
        %1130 = vrot.lane.b32.xlu0 %v484, 64
        %v1131 = vpop.permute.xlu0 %1130
        %1132 = vrot.lane.b32.xlu0 %v485, 64
        %v1133 = vpop.permute.xlu0 %1132
        %1134 = vrot.lane.b32.xlu0 %v486, 64
        %v1135 = vpop.permute.xlu0 %1134
        %1136 = vrot.lane.b32.xlu0 %v487, 64
        %v1137 = vpop.permute.xlu0 %1136
        %1138 = vrot.lane.b32.xlu0 %v488, 64
        %v1139 = vpop.permute.xlu0 %1138
        %1140 = vrot.lane.b32.xlu0 %v489, 64
        %v1141 = vpop.permute.xlu0 %1140
        %1142 = vrot.lane.b32.xlu0 %v490, 64
        %v1143 = vpop.permute.xlu0 %1142
        %1144 = vrot.lane.b32.xlu0 %v491, 64
        %v1145 = vpop.permute.xlu0 %1144
        %1146 = vrot.lane.b32.xlu0 %v492, 64
        %v1147 = vpop.permute.xlu0 %1146
        %1148 = vrot.lane.b32.xlu0 %v493, 64
        %v1149 = vpop.permute.xlu0 %1148
        %1150 = vrot.lane.b32.xlu0 %v494, 64
        %v1151 = vpop.permute.xlu0 %1150
        %1152 = vrot.lane.b32.xlu0 %v495, 64
        %v1153 = vpop.permute.xlu0 %1152
        %1154 = vrot.lane.b32.xlu0 %v496, 64
        %v1155 = vpop.permute.xlu0 %1154
        %1156 = vrot.lane.b32.xlu0 %v497, 64
        %v1157 = vpop.permute.xlu0 %1156
        %1158 = vrot.lane.b32.xlu0 %v498, 64
        %v1159 = vpop.permute.xlu0 %1158
        %1160 = vrot.lane.b32.xlu0 %v499, 64
        %v1161 = vpop.permute.xlu0 %1160
        %1162 = vrot.lane.b32.xlu0 %v500, 64
        %v1163 = vpop.permute.xlu0 %1162
        %1164 = vrot.lane.b32.xlu0 %v501, 64
        %v1165 = vpop.permute.xlu0 %1164
        %1166 = vrot.lane.b32.xlu0 %v502, 64
        %v1167 = vpop.permute.xlu0 %1166
        %1168 = vrot.lane.b32.xlu0 %v503, 64
        %v1169 = vpop.permute.xlu0 %1168
        %1170 = vrot.lane.b32.xlu0 %v504, 64
        %v1171 = vpop.permute.xlu0 %1170
        %1172 = vrot.lane.b32.xlu0 %v505, 64
        %v1173 = vpop.permute.xlu0 %1172
        %1174 = vrot.lane.b32.xlu0 %v506, 64
        %v1175 = vpop.permute.xlu0 %1174
        %1176 = vrot.lane.b32.xlu0 %v507, 64
        %v1177 = vpop.permute.xlu0 %1176
        %1178 = vrot.lane.b32.xlu0 %v508, 64
        %v1179 = vpop.permute.xlu0 %1178
        %1180 = vrot.lane.b32.xlu0 %v509, 64
        %v1181 = vpop.permute.xlu0 %1180
        %1246 = vrot.lane.b32.xlu0 %v510, 96
        %v1247 = vpop.permute.xlu0 %1246
        %1248 = vrot.lane.b32.xlu0 %v511, 96
        %v1249 = vpop.permute.xlu0 %1248
        %1250 = vrot.lane.b32.xlu0 %v512, 96
        %v1251 = vpop.permute.xlu0 %1250
        %1252 = vrot.lane.b32.xlu0 %v513, 96
        %v1253 = vpop.permute.xlu0 %1252
        %1254 = vrot.lane.b32.xlu0 %v514, 96
        %v1255 = vpop.permute.xlu0 %1254
        %1256 = vrot.lane.b32.xlu0 %v515, 96
        %v1257 = vpop.permute.xlu0 %1256
        %1258 = vrot.lane.b32.xlu0 %v516, 96
        %v1259 = vpop.permute.xlu0 %1258
        %1260 = vrot.lane.b32.xlu0 %v517, 96
        %v1261 = vpop.permute.xlu0 %1260
        %1262 = vrot.lane.b32.xlu0 %v518, 96
        %v1263 = vpop.permute.xlu0 %1262
        %1264 = vrot.lane.b32.xlu0 %v519, 96
        %v1265 = vpop.permute.xlu0 %1264
        %1266 = vrot.lane.b32.xlu0 %v520, 96
        %v1267 = vpop.permute.xlu0 %1266
        %1268 = vrot.lane.b32.xlu0 %v521, 96
        %v1269 = vpop.permute.xlu0 %1268
        %1270 = vrot.lane.b32.xlu0 %v522, 96
        %v1271 = vpop.permute.xlu0 %1270
        %1272 = vrot.lane.b32.xlu0 %v523, 96
        %v1273 = vpop.permute.xlu0 %1272
        %1274 = vrot.lane.b32.xlu0 %v524, 96
        %v1275 = vpop.permute.xlu0 %1274
        %1276 = vrot.lane.b32.xlu0 %v525, 96
        %v1277 = vpop.permute.xlu0 %1276
        %1278 = vrot.lane.b32.xlu0 %v526, 96
        %v1279 = vpop.permute.xlu0 %1278
        %1280 = vrot.lane.b32.xlu0 %v527, 96
        %v1281 = vpop.permute.xlu0 %1280
        %1282 = vrot.lane.b32.xlu0 %v528, 96
        %v1283 = vpop.permute.xlu0 %1282
        %1284 = vrot.lane.b32.xlu0 %v529, 96
        %v1285 = vpop.permute.xlu0 %1284
        %1286 = vrot.lane.b32.xlu0 %v530, 96
        %v1287 = vpop.permute.xlu0 %1286
        %1288 = vrot.lane.b32.xlu0 %v531, 96
        %v1289 = vpop.permute.xlu0 %1288
        %1290 = vrot.lane.b32.xlu0 %v532, 96
        %v1291 = vpop.permute.xlu0 %1290
        %1292 = vrot.lane.b32.xlu0 %v533, 96
        %v1293 = vpop.permute.xlu0 %1292
        %1294 = vrot.lane.b32.xlu0 %v534, 96
        %v1295 = vpop.permute.xlu0 %1294
        %1296 = vrot.lane.b32.xlu0 %v535, 96
        %v1297 = vpop.permute.xlu0 %1296
        %1298 = vrot.lane.b32.xlu0 %v536, 96
        %v1299 = vpop.permute.xlu0 %1298
        %1300 = vrot.lane.b32.xlu0 %v537, 96
        %v1301 = vpop.permute.xlu0 %1300
        %1302 = vrot.lane.b32.xlu0 %v538, 96
        %v1303 = vpop.permute.xlu0 %1302
        %1304 = vrot.lane.b32.xlu0 %v539, 96
        %v1305 = vpop.permute.xlu0 %1304
        %1306 = vrot.lane.b32.xlu0 %v540, 96
        %v1307 = vpop.permute.xlu0 %1306
        %1308 = vrot.lane.b32.xlu0 %v541, 96
        %v1309 = vpop.permute.xlu0 %1308
        %vm1342 = vcmask 261120
        %v1343 = vsel %vm1342, %v284, %v607
        %v1344 = vsel %vm1342, %v285, %v609
        %v1345 = vsel %vm1342, %v286, %v611
        %v1346 = vsel %vm1342, %v287, %v613
        %v1347 = vsel %vm1342, %v288, %v615
        %v1348 = vsel %vm1342, %v289, %v617
        %v1349 = vsel %vm1342, %v290, %v619
        %v1350 = vsel %vm1342, %v291, %v621
        %v1351 = vsel %vm1342, %v292, %v623
        %v1352 = vsel %vm1342, %v293, %v625
        %v1353 = vsel %vm1342, %v294, %v627
        %v1354 = vsel %vm1342, %v295, %v629
        %v1355 = vsel %vm1342, %v296, %v631
        %v1356 = vsel %vm1342, %v297, %v633
        %v1357 = vsel %vm1342, %v298, %v635
        %v1358 = vsel %vm1342, %v299, %v637
        %v1359 = vsel %vm1342, %v300, %v639
        %v1360 = vsel %vm1342, %v301, %v641
        %v1361 = vsel %vm1342, %v302, %v643
        %v1362 = vsel %vm1342, %v303, %v645
        %v1363 = vsel %vm1342, %v304, %v647
        %v1364 = vsel %vm1342, %v305, %v649
        %v1365 = vsel %vm1342, %v306, %v651
        %v1366 = vsel %vm1342, %v307, %v653
        %v1367 = vsel %vm1342, %v308, %v655
        %v1368 = vsel %vm1342, %v309, %v657
        %v1369 = vsel %vm1342, %v310, %v659
        %v1370 = vsel %vm1342, %v311, %v661
        %v1371 = vsel %vm1342, %v312, %v663
        %v1372 = vsel %vm1342, %v313, %v665
        %v1373 = vsel %vm1342, %v314, %v667
        %v1374 = vsel %vm1342, %v315, %v669
        %vm1375 = vcmask 523264
        %v1376 = vsel %vm1375, %v1343, %v735
        %v1377 = vsel %vm1375, %v1344, %v737
        %v1378 = vsel %vm1375, %v1345, %v739
        %v1379 = vsel %vm1375, %v1346, %v741
        %v1380 = vsel %vm1375, %v1347, %v743
        %v1381 = vsel %vm1375, %v1348, %v745
        %v1382 = vsel %vm1375, %v1349, %v747
        %v1383 = vsel %vm1375, %v1350, %v749
        %v1384 = vsel %vm1375, %v1351, %v751
        %v1385 = vsel %vm1375, %v1352, %v753
        %v1386 = vsel %vm1375, %v1353, %v755
        %v1387 = vsel %vm1375, %v1354, %v757
        %v1388 = vsel %vm1375, %v1355, %v759
        %v1389 = vsel %vm1375, %v1356, %v761
        %v1390 = vsel %vm1375, %v1357, %v763
        %v1391 = vsel %vm1375, %v1358, %v765
        %v1392 = vsel %vm1375, %v1359, %v767
        %v1393 = vsel %vm1375, %v1360, %v769
        %v1394 = vsel %vm1375, %v1361, %v771
        %v1395 = vsel %vm1375, %v1362, %v773
        %v1396 = vsel %vm1375, %v1363, %v775
        %v1397 = vsel %vm1375, %v1364, %v777
        %v1398 = vsel %vm1375, %v1365, %v779
        %v1399 = vsel %vm1375, %v1366, %v781
        %v1400 = vsel %vm1375, %v1367, %v783
        %v1401 = vsel %vm1375, %v1368, %v785
        %v1402 = vsel %vm1375, %v1369, %v787
        %v1403 = vsel %vm1375, %v1370, %v789
        %v1404 = vsel %vm1375, %v1371, %v791
        %v1405 = vsel %vm1375, %v1372, %v793
        %v1406 = vsel %vm1375, %v1373, %v795
        %v1407 = vsel %vm1375, %v1374, %v797
        %vm1408 = vcmask 785408
        %v1409 = vsel %vm1408, %v1376, %v863
        %v1410 = vsel %vm1408, %v1377, %v865
        %v1411 = vsel %vm1408, %v1378, %v867
        %v1412 = vsel %vm1408, %v1379, %v869
        %v1413 = vsel %vm1408, %v1380, %v871
        %v1414 = vsel %vm1408, %v1381, %v873
        %v1415 = vsel %vm1408, %v1382, %v875
        %v1416 = vsel %vm1408, %v1383, %v877
        %v1417 = vsel %vm1408, %v1384, %v879
        %v1418 = vsel %vm1408, %v1385, %v881
        %v1419 = vsel %vm1408, %v1386, %v883
        %v1420 = vsel %vm1408, %v1387, %v885
        %v1421 = vsel %vm1408, %v1388, %v887
        %v1422 = vsel %vm1408, %v1389, %v889
        %v1423 = vsel %vm1408, %v1390, %v891
        %v1424 = vsel %vm1408, %v1391, %v893
        %v1425 = vsel %vm1408, %v1392, %v895
        %v1426 = vsel %vm1408, %v1393, %v897
        %v1427 = vsel %vm1408, %v1394, %v899
        %v1428 = vsel %vm1408, %v1395, %v901
        %v1429 = vsel %vm1408, %v1396, %v903
        %v1430 = vsel %vm1408, %v1397, %v905
        %v1431 = vsel %vm1408, %v1398, %v907
        %v1432 = vsel %vm1408, %v1399, %v909
        %v1433 = vsel %vm1408, %v1400, %v911
        %v1434 = vsel %vm1408, %v1401, %v913
        %v1435 = vsel %vm1408, %v1402, %v915
        %v1436 = vsel %vm1408, %v1403, %v917
        %v1437 = vsel %vm1408, %v1404, %v919
        %v1438 = vsel %vm1408, %v1405, %v921
        %v1439 = vsel %vm1408, %v1406, %v923
        %v1440 = vsel %vm1408, %v1407, %v925
        %v1441 = vsel %vm1342, %v413, %v991
        %v1442 = vsel %vm1342, %v414, %v993
        %v1443 = vsel %vm1342, %v415, %v995
        %v1444 = vsel %vm1342, %v416, %v997
        %v1445 = vsel %vm1342, %v417, %v999
        %v1446 = vsel %vm1342, %v418, %v1001
        %v1447 = vsel %vm1342, %v419, %v1003
        %v1448 = vsel %vm1342, %v420, %v1005
        %v1449 = vsel %vm1342, %v421, %v1007
        %v1450 = vsel %vm1342, %v422, %v1009
        %v1451 = vsel %vm1342, %v423, %v1011
        %v1452 = vsel %vm1342, %v424, %v1013
        %v1453 = vsel %vm1342, %v425, %v1015
        %v1454 = vsel %vm1342, %v426, %v1017
        %v1455 = vsel %vm1342, %v427, %v1019
        %v1456 = vsel %vm1342, %v428, %v1021
        %v1457 = vsel %vm1342, %v429, %v1023
        %v1458 = vsel %vm1342, %v430, %v1025
        %v1459 = vsel %vm1342, %v431, %v1027
        %v1460 = vsel %vm1342, %v432, %v1029
        %v1461 = vsel %vm1342, %v433, %v1031
        %v1462 = vsel %vm1342, %v434, %v1033
        %v1463 = vsel %vm1342, %v435, %v1035
        %v1464 = vsel %vm1342, %v436, %v1037
        %v1465 = vsel %vm1342, %v437, %v1039
        %v1466 = vsel %vm1342, %v438, %v1041
        %v1467 = vsel %vm1342, %v439, %v1043
        %v1468 = vsel %vm1342, %v440, %v1045
        %v1469 = vsel %vm1342, %v441, %v1047
        %v1470 = vsel %vm1342, %v442, %v1049
        %v1471 = vsel %vm1342, %v443, %v1051
        %v1472 = vsel %vm1342, %v444, %v1053
        %v1473 = vsel %vm1375, %v1441, %v1119
        %v1474 = vsel %vm1375, %v1442, %v1121
        %v1475 = vsel %vm1375, %v1443, %v1123
        %v1476 = vsel %vm1375, %v1444, %v1125
        %v1477 = vsel %vm1375, %v1445, %v1127
        %v1478 = vsel %vm1375, %v1446, %v1129
        %v1479 = vsel %vm1375, %v1447, %v1131
        %v1480 = vsel %vm1375, %v1448, %v1133
        %v1481 = vsel %vm1375, %v1449, %v1135
        %v1482 = vsel %vm1375, %v1450, %v1137
        %v1483 = vsel %vm1375, %v1451, %v1139
        %v1484 = vsel %vm1375, %v1452, %v1141
        %v1485 = vsel %vm1375, %v1453, %v1143
        %v1486 = vsel %vm1375, %v1454, %v1145
        %v1487 = vsel %vm1375, %v1455, %v1147
        %v1488 = vsel %vm1375, %v1456, %v1149
        %v1489 = vsel %vm1375, %v1457, %v1151
        %v1490 = vsel %vm1375, %v1458, %v1153
        %v1491 = vsel %vm1375, %v1459, %v1155
        %v1492 = vsel %vm1375, %v1460, %v1157
        %v1493 = vsel %vm1375, %v1461, %v1159
        %v1494 = vsel %vm1375, %v1462, %v1161
        %v1495 = vsel %vm1375, %v1463, %v1163
        %v1496 = vsel %vm1375, %v1464, %v1165
        %v1497 = vsel %vm1375, %v1465, %v1167
        %v1498 = vsel %vm1375, %v1466, %v1169
        %v1499 = vsel %vm1375, %v1467, %v1171
        %v1500 = vsel %vm1375, %v1468, %v1173
        %v1501 = vsel %vm1375, %v1469, %v1175
        %v1502 = vsel %vm1375, %v1470, %v1177
        %v1503 = vsel %vm1375, %v1471, %v1179
        %v1504 = vsel %vm1375, %v1472, %v1181
        %v1505 = vsel %vm1408, %v1473, %v1247
        %v1506 = vsel %vm1408, %v1474, %v1249
        %v1507 = vsel %vm1408, %v1475, %v1251
        %v1508 = vsel %vm1408, %v1476, %v1253
        %v1509 = vsel %vm1408, %v1477, %v1255
        %v1510 = vsel %vm1408, %v1478, %v1257
        %v1511 = vsel %vm1408, %v1479, %v1259
        %v1512 = vsel %vm1408, %v1480, %v1261
        %v1513 = vsel %vm1408, %v1481, %v1263
        %v1514 = vsel %vm1408, %v1482, %v1265
        %v1515 = vsel %vm1408, %v1483, %v1267
        %v1516 = vsel %vm1408, %v1484, %v1269
        %v1517 = vsel %vm1408, %v1485, %v1271
        %v1518 = vsel %vm1408, %v1486, %v1273
        %v1519 = vsel %vm1408, %v1487, %v1275
        %v1520 = vsel %vm1408, %v1488, %v1277
        %v1521 = vsel %vm1408, %v1489, %v1279
        %v1522 = vsel %vm1408, %v1490, %v1281
        %v1523 = vsel %vm1408, %v1491, %v1283
        %v1524 = vsel %vm1408, %v1492, %v1285
        %v1525 = vsel %vm1408, %v1493, %v1287
        %v1526 = vsel %vm1408, %v1494, %v1289
        %v1527 = vsel %vm1408, %v1495, %v1291
        %v1528 = vsel %vm1408, %v1496, %v1293
        %v1529 = vsel %vm1408, %v1497, %v1295
        %v1530 = vsel %vm1408, %v1498, %v1297
        %v1531 = vsel %vm1408, %v1499, %v1299
        %v1532 = vsel %vm1408, %v1500, %v1301
        %v1533 = vsel %vm1408, %v1501, %v1303
        %v1534 = vsel %vm1408, %v1502, %v1305
        %v1535 = vsel %vm1408, %v1503, %v1307
        %v1536 = vsel %vm1408, %v1504, %v1309
        %v1537 = vpack.c.bf16 %v1410, %v1409
        %v1538 = vpack.c.bf16 %v1506, %v1505
        %v1539 = vpack.c.bf16 %v543, %v542
        %v1540 = vpack.c.bf16 %v1412, %v1411
        %v1541 = vpack.c.bf16 %v1508, %v1507
        %v1542 = vpack.c.bf16 %v545, %v544
        %v1543 = vpack.c.bf16 %v1414, %v1413
        %v1544 = vpack.c.bf16 %v1510, %v1509
        %v1545 = vpack.c.bf16 %v547, %v546
        %v1546 = vpack.c.bf16 %v1416, %v1415
        %v1547 = vpack.c.bf16 %v1512, %v1511
        %v1548 = vpack.c.bf16 %v549, %v548
        %v1549 = vpack.c.bf16 %v1418, %v1417
        %v1550 = vpack.c.bf16 %v1514, %v1513
        %v1551 = vpack.c.bf16 %v551, %v550
        %v1552 = vpack.c.bf16 %v1420, %v1419
        %v1553 = vpack.c.bf16 %v1516, %v1515
        %v1554 = vpack.c.bf16 %v553, %v552
        %v1555 = vpack.c.bf16 %v1422, %v1421
        %v1556 = vpack.c.bf16 %v1518, %v1517
        %v1557 = vpack.c.bf16 %v555, %v554
        %v1558 = vpack.c.bf16 %v1424, %v1423
        %v1559 = vpack.c.bf16 %v1520, %v1519
        %v1560 = vpack.c.bf16 %v557, %v556
        %v1561 = vpack.c.bf16 %v1426, %v1425
        %v1562 = vpack.c.bf16 %v1522, %v1521
        %v1563 = vpack.c.bf16 %v559, %v558
        %v1564 = vpack.c.bf16 %v1428, %v1427
        %v1565 = vpack.c.bf16 %v1524, %v1523
        %v1566 = vpack.c.bf16 %v561, %v560
        %v1567 = vpack.c.bf16 %v1430, %v1429
        %v1568 = vpack.c.bf16 %v1526, %v1525
        %v1569 = vpack.c.bf16 %v563, %v562
        %v1570 = vpack.c.bf16 %v1432, %v1431
        %v1571 = vpack.c.bf16 %v1528, %v1527
        %v1572 = vpack.c.bf16 %v565, %v564
        %v1573 = vpack.c.bf16 %v1434, %v1433
        %v1574 = vpack.c.bf16 %v1530, %v1529
        %v1575 = vpack.c.bf16 %v567, %v566
        %v1576 = vpack.c.bf16 %v1436, %v1435
        %v1577 = vpack.c.bf16 %v1532, %v1531
        %v1578 = vpack.c.bf16 %v569, %v568
        %v1579 = vpack.c.bf16 %v1438, %v1437
        %v1580 = vpack.c.bf16 %v1534, %v1533
        %v1581 = vpack.c.bf16 %v571, %v570
        %v1582 = vpack.c.bf16 %v1440, %v1439
        %v1583 = vpack.c.bf16 %v1536, %v1535
        %v1584 = vpack.c.bf16 %v573, %v572
        %v1585 = vld [vmem:[%s169] sm:$0xff]
        %v1586 = vld [vmem:[%s169 + $0x8] sm:$0xff]
        %v1587 = vld [vmem:[%s169 + $0x10] sm:$0xff]
        %v1588 = vld [vmem:[%s169 + $0x18] sm:$0xff]
        %v1589 = vld [vmem:[%s169 + $0x20] sm:$0xff]
        %v1590 = vld [vmem:[%s169 + $0x28] sm:$0xff]
        %v1591 = vld [vmem:[%s169 + $0x30] sm:$0xff]
        %v1592 = vld [vmem:[%s169 + $0x38] sm:$0xff]
        %v1593 = vld [vmem:[%s169 + $0x40] sm:$0xff]
        %v1594 = vld [vmem:[%s169 + $0x48] sm:$0xff]
        %v1595 = vld [vmem:[%s169 + $0x50] sm:$0xff]
        %v1596 = vld [vmem:[%s169 + $0x58] sm:$0xff]
        %v1597 = vld [vmem:[%s169 + $0x60] sm:$0xff]
        %v1598 = vld [vmem:[%s169 + $0x68] sm:$0xff]
        %v1599 = vld [vmem:[%s169 + $0x70] sm:$0xff]
        %v1600 = vld [vmem:[%s169 + $0x78] sm:$0xff]
        %v1601 = vld [vmem:[%s169 + $0x80] sm:$0xff]
        %v1602 = vld [vmem:[%s169 + $0x88] sm:$0xff]
        %v1603 = vld [vmem:[%s169 + $0x90] sm:$0xff]
        %v1604 = vld [vmem:[%s169 + $0x98] sm:$0xff]
        %v1605 = vld [vmem:[%s169 + $0xa0] sm:$0xff]
        %v1606 = vld [vmem:[%s169 + $0xa8] sm:$0xff]
        %v1607 = vld [vmem:[%s169 + $0xb0] sm:$0xff]
        %v1608 = vld [vmem:[%s169 + $0xb8] sm:$0xff]
        %v1609 = vld [vmem:[%s169 + $0xc0] sm:$0xff]
        %v1610 = vld [vmem:[%s169 + $0xc8] sm:$0xff]
        %v1611 = vld [vmem:[%s169 + $0xd0] sm:$0xff]
        %v1612 = vld [vmem:[%s169 + $0xd8] sm:$0xff]
        %v1613 = vld [vmem:[%s169 + $0xe0] sm:$0xff]
        %v1614 = vld [vmem:[%s169 + $0xe8] sm:$0xff]
        %v1615 = vld [vmem:[%s169 + $0xf0] sm:$0xff]
        %v1616 = vld [vmem:[%s169 + $0xf8] sm:$0xff]
        %v1617 = vld [vmem:[%s1] sm:$0xf]
        %v1618 = vld [vmem:[%s1 + $0x4] sm:$0xf]
        %v1619 = vld [vmem:[%s1 + $0x8] sm:$0xf]
        %v1620 = vld [vmem:[%s1 + $0xc] sm:$0xf]
        %v1621 = vld [vmem:[%s1 + $0x10] sm:$0xf]
        %v1622 = vld [vmem:[%s1 + $0x14] sm:$0xf]
        %v1623 = vld [vmem:[%s1 + $0x18] sm:$0xf]
        %v1624 = vld [vmem:[%s1 + $0x1c] sm:$0xf]
        %v1625 = vld [vmem:[%s1 + $0x20] sm:$0xf]
        %v1626 = vld [vmem:[%s1 + $0x24] sm:$0xf]
        %v1627 = vld [vmem:[%s1 + $0x28] sm:$0xf]
        %v1628 = vld [vmem:[%s1 + $0x2c] sm:$0xf]
        %v1629 = vld [vmem:[%s1 + $0x30] sm:$0xf]
        %v1630 = vld [vmem:[%s1 + $0x34] sm:$0xf]
        %v1631 = vld [vmem:[%s1 + $0x38] sm:$0xf]
        %v1632 = vld [vmem:[%s1 + $0x3c] sm:$0xf]
        %v1633 = vld [vmem:[%s1 + $0x40] sm:$0xf]
        %v1634 = vld [vmem:[%s1 + $0x44] sm:$0xf]
        %v1635 = vld [vmem:[%s1 + $0x48] sm:$0xf]
        %v1636 = vld [vmem:[%s1 + $0x4c] sm:$0xf]
        %v1637 = vld [vmem:[%s1 + $0x50] sm:$0xf]
        %v1638 = vld [vmem:[%s1 + $0x54] sm:$0xf]
        %v1639 = vld [vmem:[%s1 + $0x58] sm:$0xf]
        %v1640 = vld [vmem:[%s1 + $0x5c] sm:$0xf]
        %v1641 = vld [vmem:[%s1 + $0x60] sm:$0xf]
        %v1642 = vld [vmem:[%s1 + $0x64] sm:$0xf]
        %v1643 = vld [vmem:[%s1 + $0x68] sm:$0xf]
        %v1644 = vld [vmem:[%s1 + $0x6c] sm:$0xf]
        %v1645 = vld [vmem:[%s1 + $0x70] sm:$0xf]
        %v1646 = vld [vmem:[%s1 + $0x74] sm:$0xf]
        %v1647 = vld [vmem:[%s1 + $0x78] sm:$0xf]
        %v1648 = vld [vmem:[%s1 + $0x7c] sm:$0xf]
        %v1649 = vld [vmem:[%s1 + $0x80] sm:$0xf]
        %v1650 = vld [vmem:[%s1 + $0x84] sm:$0xf]
        %v1651 = vld [vmem:[%s1 + $0x88] sm:$0xf]
        %v1652 = vld [vmem:[%s1 + $0x8c] sm:$0xf]
        %v1689 = vunpack.c.l.b16 %v1617
        %v1690 = vunpack.c.l.b16 %v1618
        %v1691 = vunpack.c.l.b16 %v1619
        %v1692 = vunpack.c.l.b16 %v1620
        %v1693 = vunpack.c.l.b16 %v1621
        %v1694 = vunpack.c.l.b16 %v1622
        %v1695 = vunpack.c.l.b16 %v1623
        %v1696 = vunpack.c.l.b16 %v1624
        %v1697 = vunpack.c.l.b16 %v1625
        %v1698 = vunpack.c.l.b16 %v1626
        %v1699 = vunpack.c.l.b16 %v1627
        %v1700 = vunpack.c.l.b16 %v1628
        %v1701 = vunpack.c.l.b16 %v1629
        %v1702 = vunpack.c.l.b16 %v1630
        %v1703 = vunpack.c.l.b16 %v1631
        %v1704 = vunpack.c.l.b16 %v1632
        %v1705 = vunpack.c.l.b16 %v1633
        %v1706 = vunpack.c.l.b16 %v1634
        %v1707 = vunpack.c.l.b16 %v1635
        %v1708 = vunpack.c.l.b16 %v1636
        %v1709 = vunpack.c.l.b16 %v1637
        %v1710 = vunpack.c.l.b16 %v1638
        %v1711 = vunpack.c.l.b16 %v1639
        %v1712 = vunpack.c.l.b16 %v1640
        %v1713 = vunpack.c.l.b16 %v1641
        %v1714 = vunpack.c.l.b16 %v1642
        %v1715 = vunpack.c.l.b16 %v1643
        %v1716 = vunpack.c.l.b16 %v1644
        %v1717 = vunpack.c.l.b16 %v1645
        %v1718 = vunpack.c.l.b16 %v1646
        %v1719 = vunpack.c.l.b16 %v1647
        %v1720 = vunpack.c.l.b16 %v1648
        %v1721 = vunpack.c.l.b16 %v1649
        %v1722 = vunpack.c.l.b16 %v1650
        %v1723 = vunpack.c.l.b16 %v1651
        %v1724 = vunpack.c.l.b16 %v1652
        %v1725 = vpack.c.b16 %v1690, %v1689
        %v1726 = vpack.c.b16 %v1692, %v1691
        %v1727 = vpack.c.b16 %v1694, %v1693
        %v1728 = vpack.c.b16 %v1696, %v1695
        %v1729 = vpack.c.b16 %v1698, %v1697
        %v1730 = vpack.c.b16 %v1700, %v1699
        %v1731 = vpack.c.b16 %v1702, %v1701
        %v1732 = vpack.c.b16 %v1704, %v1703
        %v1733 = vpack.c.b16 %v1706, %v1705
        %v1734 = vpack.c.b16 %v1708, %v1707
        %v1735 = vpack.c.b16 %v1710, %v1709
        %v1736 = vpack.c.b16 %v1712, %v1711
        %v1737 = vpack.c.b16 %v1714, %v1713
        %v1738 = vpack.c.b16 %v1716, %v1715
        %v1739 = vpack.c.b16 %v1718, %v1717
        %v1740 = vpack.c.b16 %v1720, %v1719
        %v1741 = vpack.c.b16 %v1722, %v1721
        %v1742 = vpack.c.b16 %v1724, %v1723
        %v1762 = vsel %vm1342, %v1539, 0
        %v1765 = vsel %vm1342, %v1542, 0
        %v1768 = vsel %vm1342, %v1545, 0
        %v1771 = vsel %vm1342, %v1548, 0
        %v1774 = vsel %vm1342, %v1551, 0
        %v1777 = vsel %vm1342, %v1554, 0
        %v1780 = vsel %vm1342, %v1557, 0
        %v1783 = vsel %vm1342, %v1560, 0
        %v1786 = vsel %vm1342, %v1563, 0
        %v1789 = vsel %vm1342, %v1566, 0
        %v1792 = vsel %vm1342, %v1569, 0
        %v1795 = vsel %vm1342, %v1572, 0
        %v1798 = vsel %vm1342, %v1575, 0
        %v1801 = vsel %vm1342, %v1578, 0
        %v1804 = vsel %vm1342, %v1581, 0
        %v1807 = vsel %vm1342, %v1584, 0
        %1809 = vmatprep.subr.bf16.mxu0 0
        %1810 = vmatpush1.bf16.msra.mxu0 %v1725
        %1811 = vmatprep.subr.bf16.mxu0 0
        %1812 = vmatpush1.bf16.msra.mxu0 %v1726
        %1813 = vmatprep.subr.bf16.mxu0 0
        %1814 = vmatpush1.bf16.msra.mxu0 %v1727
        %1815 = vmatprep.subr.bf16.mxu0 0
        %1816 = vmatpush1.bf16.msra.mxu0 %v1728
        %1817 = vmatprep.subr.bf16.mxu0 0
        %1818 = vmatpush1.bf16.msra.mxu0 %v1729
        %1819 = vmatprep.subr.bf16.mxu0 0
        %1820 = vmatpush1.bf16.msra.mxu0 %v1730
        %1821 = vmatprep.subr.bf16.mxu0 0
        %1822 = vmatpush1.bf16.msra.mxu0 %v1731
        %1823 = vmatprep.subr.bf16.mxu0 0
        %1824 = vmatpush1.bf16.msra.mxu0 %v1732
        %1825 = vmatprep.subr.bf16.mxu0 0
        %1826 = vmatpush1.bf16.msra.mxu0 %v1733
        %1827 = vmatprep.subr.bf16.mxu0 0
        %1828 = vmatpush1.bf16.msra.mxu0 %v1734
        %1829 = vmatprep.subr.bf16.mxu0 0
        %1830 = vmatpush1.bf16.msra.mxu0 %v1735
        %1831 = vmatprep.subr.bf16.mxu0 0
        %1832 = vmatpush1.bf16.msra.mxu0 %v1736
        %1833 = vmatprep.subr.bf16.mxu0 0
        %1834 = vmatpush1.bf16.msra.mxu0 %v1737
        %1835 = vmatprep.subr.bf16.mxu0 0
        %1836 = vmatpush1.bf16.msra.mxu0 %v1738
        %1837 = vmatprep.subr.bf16.mxu0 0
        %1838 = vmatpush1.bf16.msra.mxu0 %v1739
        %1839 = vmatprep.subr.bf16.mxu0 0
        %1840 = vmatpush1.bf16.msra.mxu0 %v1740
        %1841 = vmatprep.mubr.bf16.mxu0 %v1538
        %1842 = vmatmul.mubr.bf16.gmra.mrb[0].mxu0 %v1537
        %v1843 = vpop.f32.mrb[0].mxu0
        %v1844 = vadd.f32 0.0, %v1843
        %v1845 = vpop.f32.mrb[0].mxu0
        %v1846 = vpop.f32.mrb[0].mxu0
        %v1847 = vadd.f32 0.0, %v1846
        %v1848 = vpop.f32.mrb[0].mxu0
        %1849 = vmatprep.mubr.bf16.mxu0 %v1541
        %1850 = vmatmul.mubr.bf16.gmra.mrb[0].mxu0 %v1540
        %v1851 = vpop.f32.mrb[0].mxu0
        %v1852 = vadd.f32 0.0, %v1851
        %v1853 = vpop.f32.mrb[0].mxu0
        %v1854 = vpop.f32.mrb[0].mxu0
        %v1855 = vadd.f32 0.0, %v1854
        %v1856 = vpop.f32.mrb[0].mxu0
        %1857 = vmatprep.mubr.bf16.mxu0 %v1544
        %1858 = vmatmul.mubr.bf16.gmra.mrb[0].mxu0 %v1543
        %v1859 = vpop.f32.mrb[0].mxu0
        %v1860 = vadd.f32 0.0, %v1859
        %v1861 = vpop.f32.mrb[0].mxu0
        %v1862 = vpop.f32.mrb[0].mxu0
        %v1863 = vadd.f32 0.0, %v1862
        %v1864 = vpop.f32.mrb[0].mxu0
        %1865 = vmatprep.mubr.bf16.mxu0 %v1547
        %1866 = vmatmul.mubr.bf16.gmra.mrb[0].mxu0 %v1546
        %v1867 = vpop.f32.mrb[0].mxu0
        %v1868 = vadd.f32 0.0, %v1867
        %v1869 = vpop.f32.mrb[0].mxu0
        %v1870 = vpop.f32.mrb[0].mxu0
        %v1871 = vadd.f32 0.0, %v1870
        %v1872 = vpop.f32.mrb[0].mxu0
        %1873 = vmatprep.mubr.bf16.mxu0 %v1550
        %1874 = vmatmul.mubr.bf16.gmra.mrb[0].mxu0 %v1549
        %v1875 = vpop.f32.mrb[0].mxu0
        %v1876 = vadd.f32 0.0, %v1875
        %v1877 = vpop.f32.mrb[0].mxu0
        %v1878 = vpop.f32.mrb[0].mxu0
        %v1879 = vadd.f32 0.0, %v1878
        %v1880 = vpop.f32.mrb[0].mxu0
        %1881 = vmatprep.mubr.bf16.mxu0 %v1553
        %1882 = vmatmul.mubr.bf16.gmra.mrb[0].mxu0 %v1552
        %v1883 = vpop.f32.mrb[0].mxu0
        %v1884 = vadd.f32 0.0, %v1883
        %v1885 = vpop.f32.mrb[0].mxu0
        %v1886 = vpop.f32.mrb[0].mxu0
        %v1887 = vadd.f32 0.0, %v1886
        %v1888 = vpop.f32.mrb[0].mxu0
        %1889 = vmatprep.mubr.bf16.mxu0 %v1556
        %1890 = vmatmul.mubr.bf16.gmra.mrb[0].mxu0 %v1555
        %v1891 = vpop.f32.mrb[0].mxu0
        %v1892 = vadd.f32 0.0, %v1891
        %v1893 = vpop.f32.mrb[0].mxu0
        %v1894 = vpop.f32.mrb[0].mxu0
        %v1895 = vadd.f32 0.0, %v1894
        %v1896 = vpop.f32.mrb[0].mxu0
        %1897 = vmatprep.mubr.bf16.mxu0 %v1559
        %1898 = vmatmul.mubr.bf16.gmra.mrb[0].mxu0 %v1558
        %v1899 = vpop.f32.mrb[0].mxu0
        %v1900 = vadd.f32 0.0, %v1899
        %v1901 = vpop.f32.mrb[0].mxu0
        %v1902 = vpop.f32.mrb[0].mxu0
        %v1903 = vadd.f32 0.0, %v1902
        %v1904 = vpop.f32.mrb[0].mxu0
        %1905 = vmatprep.mubr.bf16.mxu0 %v1562
        %1906 = vmatmul.mubr.bf16.gmra.mrb[0].mxu0 %v1561
        %v1907 = vpop.f32.mrb[0].mxu0
        %v1908 = vadd.f32 0.0, %v1907
        %v1909 = vpop.f32.mrb[0].mxu0
        %v1910 = vpop.f32.mrb[0].mxu0
        %v1911 = vadd.f32 0.0, %v1910
        %v1912 = vpop.f32.mrb[0].mxu0
        %1913 = vmatprep.mubr.bf16.mxu0 %v1565
        %1914 = vmatmul.mubr.bf16.gmra.mrb[0].mxu0 %v1564
        %v1915 = vpop.f32.mrb[0].mxu0
        %v1916 = vadd.f32 0.0, %v1915
        %v1917 = vpop.f32.mrb[0].mxu0
        %v1918 = vpop.f32.mrb[0].mxu0
        %v1919 = vadd.f32 0.0, %v1918
        %v1920 = vpop.f32.mrb[0].mxu0
        %1921 = vmatprep.mubr.bf16.mxu0 %v1568
        %1922 = vmatmul.mubr.bf16.gmra.mrb[0].mxu0 %v1567
        %v1923 = vpop.f32.mrb[0].mxu0
        %v1924 = vadd.f32 0.0, %v1923
        %v1925 = vpop.f32.mrb[0].mxu0
        %v1926 = vpop.f32.mrb[0].mxu0
        %v1927 = vadd.f32 0.0, %v1926
        %v1928 = vpop.f32.mrb[0].mxu0
        %1929 = vmatprep.mubr.bf16.mxu0 %v1571
        %1930 = vmatmul.mubr.bf16.gmra.mrb[0].mxu0 %v1570
        %v1931 = vpop.f32.mrb[0].mxu0
        %v1932 = vadd.f32 0.0, %v1931
        %v1933 = vpop.f32.mrb[0].mxu0
        %v1934 = vpop.f32.mrb[0].mxu0
        %v1935 = vadd.f32 0.0, %v1934
        %v1936 = vpop.f32.mrb[0].mxu0
        %1937 = vmatprep.mubr.bf16.mxu0 %v1574
        %1938 = vmatmul.mubr.bf16.gmra.mrb[0].mxu0 %v1573
        %v1939 = vpop.f32.mrb[0].mxu0
        %v1940 = vadd.f32 0.0, %v1939
        %v1941 = vpop.f32.mrb[0].mxu0
        %v1942 = vpop.f32.mrb[0].mxu0
        %v1943 = vadd.f32 0.0, %v1942
        %v1944 = vpop.f32.mrb[0].mxu0
        %1945 = vmatprep.mubr.bf16.mxu0 %v1577
        %1946 = vmatmul.mubr.bf16.gmra.mrb[0].mxu0 %v1576
        %v1947 = vpop.f32.mrb[0].mxu0
        %v1948 = vadd.f32 0.0, %v1947
        %v1949 = vpop.f32.mrb[0].mxu0
        %v1950 = vpop.f32.mrb[0].mxu0
        %v1951 = vadd.f32 0.0, %v1950
        %v1952 = vpop.f32.mrb[0].mxu0
        %1953 = vmatprep.mubr.bf16.mxu0 %v1580
        %1954 = vmatmul.mubr.bf16.gmra.mrb[0].mxu0 %v1579
        %v1955 = vpop.f32.mrb[0].mxu0
        %v1956 = vadd.f32 0.0, %v1955
        %v1957 = vpop.f32.mrb[0].mxu0
        %v1958 = vpop.f32.mrb[0].mxu0
        %v1959 = vadd.f32 0.0, %v1958
        %v1960 = vpop.f32.mrb[0].mxu0
        %1961 = vmatprep.mubr.bf16.mxu0 %v1583
        %1962 = vmatmul.mubr.bf16.gmra.mrb[0].mxu0 %v1582
        %v1963 = vpop.f32.mrb[0].mxu0
        %v1964 = vadd.f32 0.0, %v1963
        %v1965 = vpop.f32.mrb[0].mxu0
        %v1966 = vpop.f32.mrb[0].mxu0
        %v1967 = vadd.f32 0.0, %v1966
        %v1968 = vpop.f32.mrb[0].mxu0
        %1969 = vdwg.mxu0
        %1970 = vmatprep.subr.bf16.mxu0 0
        %1971 = vmatpush1.bf16.msra.mxu0 %v1741
        %1972 = vmatprep.subr.bf16.mxu0 0
        %1973 = vmatpush1.bf16.msra.mxu0 %v1742
        %1974 = vmatprep.subr.bf16.mxu0 0
        %1975 = vmatpush1.bf16.msra.mxu0 0
        %1976 = vmatprep.subr.bf16.mxu0 0
        %1977 = vmatpush1.bf16.msra.mxu0 0
        %1978 = vmatprep.subr.bf16.mxu0 0
        %1979 = vmatpush1.bf16.msra.mxu0 0
        %1980 = vmatprep.subr.bf16.mxu0 0
        %1981 = vmatpush1.bf16.msra.mxu0 0
        %1982 = vmatprep.subr.bf16.mxu0 0
        %1983 = vmatpush1.bf16.msra.mxu0 0
        %1984 = vmatprep.subr.bf16.mxu0 0
        %1985 = vmatpush1.bf16.msra.mxu0 0
        %1986 = vmatprep.subr.bf16.mxu0 0
        %1987 = vmatpush1.bf16.msra.mxu0 0
        %1988 = vmatprep.subr.bf16.mxu0 0
        %1989 = vmatpush1.bf16.msra.mxu0 0
        %1990 = vmatprep.subr.bf16.mxu0 0
        %1991 = vmatpush1.bf16.msra.mxu0 0
        %1992 = vmatprep.subr.bf16.mxu0 0
        %1993 = vmatpush1.bf16.msra.mxu0 0
        %1994 = vmatprep.subr.bf16.mxu0 0
        %1995 = vmatpush1.bf16.msra.mxu0 0
        %1996 = vmatprep.subr.bf16.mxu0 0
        %1997 = vmatpush1.bf16.msra.mxu0 0
        %1998 = vmatprep.subr.bf16.mxu0 0
        %1999 = vmatpush1.bf16.msra.mxu0 0
        %2000 = vmatprep.subr.bf16.mxu0 0
        %2001 = vmatpush1.bf16.msra.mxu0 0
        %2002 = vmatprep.mubr.bf16.mxu0 0
        %2003 = vmatmul.mubr.bf16.gmra.mrb[0].mxu0 %v1762
        %v2004 = vpop.f32.mrb[0].mxu0
        %v2005 = vadd.f32 %v1844, %v2004
        %v2006 = vpop.f32.mrb[0].mxu0
        %v2007 = vpop.f32.mrb[0].mxu0
        %v2008 = vadd.f32 %v1847, %v2007
        %v2009 = vpop.f32.mrb[0].mxu0
        %2010 = vmatprep.mubr.bf16.mxu0 0
        %2011 = vmatmul.mubr.bf16.gmra.mrb[0].mxu0 %v1765
        %v2012 = vpop.f32.mrb[0].mxu0
        %v2013 = vadd.f32 %v1852, %v2012
        %v2014 = vpop.f32.mrb[0].mxu0
        %v2015 = vpop.f32.mrb[0].mxu0
        %v2016 = vadd.f32 %v1855, %v2015
        %v2017 = vpop.f32.mrb[0].mxu0
        %2018 = vmatprep.mubr.bf16.mxu0 0
        %2019 = vmatmul.mubr.bf16.gmra.mrb[0].mxu0 %v1768
        %v2020 = vpop.f32.mrb[0].mxu0
        %v2021 = vadd.f32 %v1860, %v2020
        %v2022 = vpop.f32.mrb[0].mxu0
        %v2023 = vpop.f32.mrb[0].mxu0
        %v2024 = vadd.f32 %v1863, %v2023
        %v2025 = vpop.f32.mrb[0].mxu0
        %2026 = vmatprep.mubr.bf16.mxu0 0
        %2027 = vmatmul.mubr.bf16.gmra.mrb[0].mxu0 %v1771
        %v2028 = vpop.f32.mrb[0].mxu0
        %v2029 = vadd.f32 %v1868, %v2028
        %v2030 = vpop.f32.mrb[0].mxu0
        %v2031 = vpop.f32.mrb[0].mxu0
        %v2032 = vadd.f32 %v1871, %v2031
        %v2033 = vpop.f32.mrb[0].mxu0
        %2034 = vmatprep.mubr.bf16.mxu0 0
        %2035 = vmatmul.mubr.bf16.gmra.mrb[0].mxu0 %v1774
        %v2036 = vpop.f32.mrb[0].mxu0
        %v2037 = vadd.f32 %v1876, %v2036
        %v2038 = vpop.f32.mrb[0].mxu0
        %v2039 = vpop.f32.mrb[0].mxu0
        %v2040 = vadd.f32 %v1879, %v2039
        %v2041 = vpop.f32.mrb[0].mxu0
        %2042 = vmatprep.mubr.bf16.mxu0 0
        %2043 = vmatmul.mubr.bf16.gmra.mrb[0].mxu0 %v1777
        %v2044 = vpop.f32.mrb[0].mxu0
        %v2045 = vadd.f32 %v1884, %v2044
        %v2046 = vpop.f32.mrb[0].mxu0
        %v2047 = vpop.f32.mrb[0].mxu0
        %v2048 = vadd.f32 %v1887, %v2047
        %v2049 = vpop.f32.mrb[0].mxu0
        %2050 = vmatprep.mubr.bf16.mxu0 0
        %2051 = vmatmul.mubr.bf16.gmra.mrb[0].mxu0 %v1780
        %v2052 = vpop.f32.mrb[0].mxu0
        %v2053 = vadd.f32 %v1892, %v2052
        %v2054 = vpop.f32.mrb[0].mxu0
        %v2055 = vpop.f32.mrb[0].mxu0
        %v2056 = vadd.f32 %v1895, %v2055
        %v2057 = vpop.f32.mrb[0].mxu0
        %2058 = vmatprep.mubr.bf16.mxu0 0
        %2059 = vmatmul.mubr.bf16.gmra.mrb[0].mxu0 %v1783
        %v2060 = vpop.f32.mrb[0].mxu0
        %v2061 = vadd.f32 %v1900, %v2060
        %v2062 = vpop.f32.mrb[0].mxu0
        %v2063 = vpop.f32.mrb[0].mxu0
        %v2064 = vadd.f32 %v1903, %v2063
        %v2065 = vpop.f32.mrb[0].mxu0
        %2066 = vmatprep.mubr.bf16.mxu0 0
        %2067 = vmatmul.mubr.bf16.gmra.mrb[0].mxu0 %v1786
        %v2068 = vpop.f32.mrb[0].mxu0
        %v2069 = vadd.f32 %v1908, %v2068
        %v2070 = vpop.f32.mrb[0].mxu0
        %v2071 = vpop.f32.mrb[0].mxu0
        %v2072 = vadd.f32 %v1911, %v2071
        %v2073 = vpop.f32.mrb[0].mxu0
        %2074 = vmatprep.mubr.bf16.mxu0 0
        %2075 = vmatmul.mubr.bf16.gmra.mrb[0].mxu0 %v1789
        %v2076 = vpop.f32.mrb[0].mxu0
        %v2077 = vadd.f32 %v1916, %v2076
        %v2078 = vpop.f32.mrb[0].mxu0
        %v2079 = vpop.f32.mrb[0].mxu0
        %v2080 = vadd.f32 %v1919, %v2079
        %v2081 = vpop.f32.mrb[0].mxu0
        %2082 = vmatprep.mubr.bf16.mxu0 0
        %2083 = vmatmul.mubr.bf16.gmra.mrb[0].mxu0 %v1792
        %v2084 = vpop.f32.mrb[0].mxu0
        %v2085 = vadd.f32 %v1924, %v2084
        %v2086 = vpop.f32.mrb[0].mxu0
        %v2087 = vpop.f32.mrb[0].mxu0
        %v2088 = vadd.f32 %v1927, %v2087
        %v2089 = vpop.f32.mrb[0].mxu0
        %2090 = vmatprep.mubr.bf16.mxu0 0
        %2091 = vmatmul.mubr.bf16.gmra.mrb[0].mxu0 %v1795
        %v2092 = vpop.f32.mrb[0].mxu0
        %v2093 = vadd.f32 %v1932, %v2092
        %v2094 = vpop.f32.mrb[0].mxu0
        %v2095 = vpop.f32.mrb[0].mxu0
        %v2096 = vadd.f32 %v1935, %v2095
        %v2097 = vpop.f32.mrb[0].mxu0
        %2098 = vmatprep.mubr.bf16.mxu0 0
        %2099 = vmatmul.mubr.bf16.gmra.mrb[0].mxu0 %v1798
        %v2100 = vpop.f32.mrb[0].mxu0
        %v2101 = vadd.f32 %v1940, %v2100
        %v2102 = vpop.f32.mrb[0].mxu0
        %v2103 = vpop.f32.mrb[0].mxu0
        %v2104 = vadd.f32 %v1943, %v2103
        %v2105 = vpop.f32.mrb[0].mxu0
        %2106 = vmatprep.mubr.bf16.mxu0 0
        %2107 = vmatmul.mubr.bf16.gmra.mrb[0].mxu0 %v1801
        %v2108 = vpop.f32.mrb[0].mxu0
        %v2109 = vadd.f32 %v1948, %v2108
        %v2110 = vpop.f32.mrb[0].mxu0
        %v2111 = vpop.f32.mrb[0].mxu0
        %v2112 = vadd.f32 %v1951, %v2111
        %v2113 = vpop.f32.mrb[0].mxu0
        %2114 = vmatprep.mubr.bf16.mxu0 0
        %2115 = vmatmul.mubr.bf16.gmra.mrb[0].mxu0 %v1804
        %v2116 = vpop.f32.mrb[0].mxu0
        %v2117 = vadd.f32 %v1956, %v2116
        %v2118 = vpop.f32.mrb[0].mxu0
        %v2119 = vpop.f32.mrb[0].mxu0
        %v2120 = vadd.f32 %v1959, %v2119
        %v2121 = vpop.f32.mrb[0].mxu0
        %2122 = vmatprep.mubr.bf16.mxu0 0
        %2123 = vmatmul.mubr.bf16.gmra.mrb[0].mxu0 %v1807
        %v2124 = vpop.f32.mrb[0].mxu0
        %v2125 = vadd.f32 %v1964, %v2124
        %v2126 = vpop.f32.mrb[0].mxu0
        %v2127 = vpop.f32.mrb[0].mxu0
        %v2128 = vadd.f32 %v1967, %v2127
        %v2129 = vpop.f32.mrb[0].mxu0
        %2130 = vdwg.mxu0
        %v2131 = vadd.f32 %v1585, %v2005
        %v2132 = vadd.f32 %v1586, %v2008
        %v2133 = vadd.f32 %v1587, %v2013
        %v2134 = vadd.f32 %v1588, %v2016
        %v2135 = vadd.f32 %v1589, %v2021
        %v2136 = vadd.f32 %v1590, %v2024
        %v2137 = vadd.f32 %v1591, %v2029
        %v2138 = vadd.f32 %v1592, %v2032
        %v2139 = vadd.f32 %v1593, %v2037
        %v2140 = vadd.f32 %v1594, %v2040
        %v2141 = vadd.f32 %v1595, %v2045
        %v2142 = vadd.f32 %v1596, %v2048
        %v2143 = vadd.f32 %v1597, %v2053
        %v2144 = vadd.f32 %v1598, %v2056
        %v2145 = vadd.f32 %v1599, %v2061
        %v2146 = vadd.f32 %v1600, %v2064
        %v2147 = vadd.f32 %v1601, %v2069
        %v2148 = vadd.f32 %v1602, %v2072
        %v2149 = vadd.f32 %v1603, %v2077
        %v2150 = vadd.f32 %v1604, %v2080
        %v2151 = vadd.f32 %v1605, %v2085
        %v2152 = vadd.f32 %v1606, %v2088
        %v2153 = vadd.f32 %v1607, %v2093
        %v2154 = vadd.f32 %v1608, %v2096
        %v2155 = vadd.f32 %v1609, %v2101
        %v2156 = vadd.f32 %v1610, %v2104
        %v2157 = vadd.f32 %v1611, %v2109
        %v2158 = vadd.f32 %v1612, %v2112
        %v2159 = vadd.f32 %v1613, %v2117
        %v2160 = vadd.f32 %v1614, %v2120
        %v2161 = vadd.f32 %v1615, %v2125
        %v2162 = vadd.f32 %v1616, %v2128
        %v2163 = vxor.u32 %v2131, 2147483648
        %v2164 = vxor.u32 %v2132, 2147483648
        %v2165 = vxor.u32 %v2133, 2147483648
        %v2166 = vxor.u32 %v2134, 2147483648
        %v2167 = vxor.u32 %v2135, 2147483648
        %v2168 = vxor.u32 %v2136, 2147483648
        %v2169 = vxor.u32 %v2137, 2147483648
        %v2170 = vxor.u32 %v2138, 2147483648
        %v2171 = vxor.u32 %v2139, 2147483648
        %v2172 = vxor.u32 %v2140, 2147483648
        %v2173 = vxor.u32 %v2141, 2147483648
        %v2174 = vxor.u32 %v2142, 2147483648
        %v2175 = vxor.u32 %v2143, 2147483648
        %v2176 = vxor.u32 %v2144, 2147483648
        %v2177 = vxor.u32 %v2145, 2147483648
        %v2178 = vxor.u32 %v2146, 2147483648
        %v2179 = vxor.u32 %v2147, 2147483648
        %v2180 = vxor.u32 %v2148, 2147483648
        %v2181 = vxor.u32 %v2149, 2147483648
        %v2182 = vxor.u32 %v2150, 2147483648
        %v2183 = vxor.u32 %v2151, 2147483648
        %v2184 = vxor.u32 %v2152, 2147483648
        %v2185 = vxor.u32 %v2153, 2147483648
        %v2186 = vxor.u32 %v2154, 2147483648
        %v2187 = vxor.u32 %v2155, 2147483648
        %v2188 = vxor.u32 %v2156, 2147483648
        %v2189 = vxor.u32 %v2157, 2147483648
        %v2190 = vxor.u32 %v2158, 2147483648
        %v2191 = vxor.u32 %v2159, 2147483648
        %v2192 = vxor.u32 %v2160, 2147483648
        %v2193 = vxor.u32 %v2161, 2147483648
        %v2194 = vxor.u32 %v2162, 2147483648
        %v2195 = vmul.f32 %v2163, 1.442695
        %v2196 = vpow.pop %v2195
        %v2197 = vmul.f32 %v2164, 1.442695
        %v2198 = vpow.pop %v2197
        %v2199 = vmul.f32 %v2165, 1.442695
        %v2200 = vpow.pop %v2199
        %v2201 = vmul.f32 %v2166, 1.442695
        %v2202 = vpow.pop %v2201
        %v2203 = vmul.f32 %v2167, 1.442695
        %v2204 = vpow.pop %v2203
        %v2205 = vmul.f32 %v2168, 1.442695
        %v2206 = vpow.pop %v2205
        %v2207 = vmul.f32 %v2169, 1.442695
        %v2208 = vpow.pop %v2207
        %v2209 = vmul.f32 %v2170, 1.442695
        %v2210 = vpow.pop %v2209
        %v2211 = vmul.f32 %v2171, 1.442695
        %v2212 = vpow.pop %v2211
        %v2213 = vmul.f32 %v2172, 1.442695
        %v2214 = vpow.pop %v2213
        %v2215 = vmul.f32 %v2173, 1.442695
        %v2216 = vpow.pop %v2215
        %v2217 = vmul.f32 %v2174, 1.442695
        %v2218 = vpow.pop %v2217
        %v2219 = vmul.f32 %v2175, 1.442695
        %v2220 = vpow.pop %v2219
        %v2221 = vmul.f32 %v2176, 1.442695
        %v2222 = vpow.pop %v2221
        %v2223 = vmul.f32 %v2177, 1.442695
        %v2224 = vpow.pop %v2223
        %v2225 = vmul.f32 %v2178, 1.442695
        %v2226 = vpow.pop %v2225
        %v2227 = vmul.f32 %v2179, 1.442695
        %v2228 = vpow.pop %v2227
        %v2229 = vmul.f32 %v2180, 1.442695
        %v2230 = vpow.pop %v2229
        %v2231 = vmul.f32 %v2181, 1.442695
        %v2232 = vpow.pop %v2231
        %v2233 = vmul.f32 %v2182, 1.442695
        %v2234 = vpow.pop %v2233
        %v2235 = vmul.f32 %v2183, 1.442695
        %v2236 = vpow.pop %v2235
        %v2237 = vmul.f32 %v2184, 1.442695
        %v2238 = vpow.pop %v2237
        %v2239 = vmul.f32 %v2185, 1.442695
        %v2240 = vpow.pop %v2239
        %v2241 = vmul.f32 %v2186, 1.442695
        %v2242 = vpow.pop %v2241
        %v2243 = vmul.f32 %v2187, 1.442695
        %v2244 = vpow.pop %v2243
        %v2245 = vmul.f32 %v2188, 1.442695
        %v2246 = vpow.pop %v2245
        %v2247 = vmul.f32 %v2189, 1.442695
        %v2248 = vpow.pop %v2247
        %v2249 = vmul.f32 %v2190, 1.442695
        %v2250 = vpow.pop %v2249
        %v2251 = vmul.f32 %v2191, 1.442695
        %v2252 = vpow.pop %v2251
        %v2253 = vmul.f32 %v2192, 1.442695
        %v2254 = vpow.pop %v2253
        %v2255 = vmul.f32 %v2193, 1.442695
        %v2256 = vpow.pop %v2255
        %v2257 = vmul.f32 %v2194, 1.442695
        %v2258 = vpow.pop %v2257
        %v2259 = vadd.f32 %v2196, 1.0
        %v2260 = vadd.f32 %v2198, 1.0
        %v2261 = vadd.f32 %v2200, 1.0
        %v2262 = vadd.f32 %v2202, 1.0
        %v2263 = vadd.f32 %v2204, 1.0
        %v2264 = vadd.f32 %v2206, 1.0
        %v2265 = vadd.f32 %v2208, 1.0
        %v2266 = vadd.f32 %v2210, 1.0
        %v2267 = vadd.f32 %v2212, 1.0
        %v2268 = vadd.f32 %v2214, 1.0
        %v2269 = vadd.f32 %v2216, 1.0
        %v2270 = vadd.f32 %v2218, 1.0
        %v2271 = vadd.f32 %v2220, 1.0
        %v2272 = vadd.f32 %v2222, 1.0
        %v2273 = vadd.f32 %v2224, 1.0
        %v2274 = vadd.f32 %v2226, 1.0
        %v2275 = vadd.f32 %v2228, 1.0
        %v2276 = vadd.f32 %v2230, 1.0
        %v2277 = vadd.f32 %v2232, 1.0
        %v2278 = vadd.f32 %v2234, 1.0
        %v2279 = vadd.f32 %v2236, 1.0
        %v2280 = vadd.f32 %v2238, 1.0
        %v2281 = vadd.f32 %v2240, 1.0
        %v2282 = vadd.f32 %v2242, 1.0
        %v2283 = vadd.f32 %v2244, 1.0
        %v2284 = vadd.f32 %v2246, 1.0
        %v2285 = vadd.f32 %v2248, 1.0
        %v2286 = vadd.f32 %v2250, 1.0
        %v2287 = vadd.f32 %v2252, 1.0
        %v2288 = vadd.f32 %v2254, 1.0
        %v2289 = vadd.f32 %v2256, 1.0
        %v2290 = vadd.f32 %v2258, 1.0
        %v2291 = vrcp.pop %v2259
        %v2292 = vmul.f32 1.0, %v2291
        %v2293 = vrcp.pop %v2260
        %v2294 = vmul.f32 1.0, %v2293
        %v2295 = vrcp.pop %v2261
        %v2296 = vmul.f32 1.0, %v2295
        %v2297 = vrcp.pop %v2262
        %v2298 = vmul.f32 1.0, %v2297
        %v2299 = vrcp.pop %v2263
        %v2300 = vmul.f32 1.0, %v2299
        %v2301 = vrcp.pop %v2264
        %v2302 = vmul.f32 1.0, %v2301
        %v2303 = vrcp.pop %v2265
        %v2304 = vmul.f32 1.0, %v2303
        %v2305 = vrcp.pop %v2266
        %v2306 = vmul.f32 1.0, %v2305
        %v2307 = vrcp.pop %v2267
        %v2308 = vmul.f32 1.0, %v2307
        %v2309 = vrcp.pop %v2268
        %v2310 = vmul.f32 1.0, %v2309
        %v2311 = vrcp.pop %v2269
        %v2312 = vmul.f32 1.0, %v2311
        %v2313 = vrcp.pop %v2270
        %v2314 = vmul.f32 1.0, %v2313
        %v2315 = vrcp.pop %v2271
        %v2316 = vmul.f32 1.0, %v2315
        %v2317 = vrcp.pop %v2272
        %v2318 = vmul.f32 1.0, %v2317
        %v2319 = vrcp.pop %v2273
        %v2320 = vmul.f32 1.0, %v2319
        %v2321 = vrcp.pop %v2274
        %v2322 = vmul.f32 1.0, %v2321
        %v2323 = vrcp.pop %v2275
        %v2324 = vmul.f32 1.0, %v2323
        %v2325 = vrcp.pop %v2276
        %v2326 = vmul.f32 1.0, %v2325
        %v2327 = vrcp.pop %v2277
        %v2328 = vmul.f32 1.0, %v2327
        %v2329 = vrcp.pop %v2278
        %v2330 = vmul.f32 1.0, %v2329
        %v2331 = vrcp.pop %v2279
        %v2332 = vmul.f32 1.0, %v2331
        %v2333 = vrcp.pop %v2280
        %v2334 = vmul.f32 1.0, %v2333
        %v2335 = vrcp.pop %v2281
        %v2336 = vmul.f32 1.0, %v2335
        %v2337 = vrcp.pop %v2282
        %v2338 = vmul.f32 1.0, %v2337
        %v2339 = vrcp.pop %v2283
        %v2340 = vmul.f32 1.0, %v2339
        %v2341 = vrcp.pop %v2284
        %v2342 = vmul.f32 1.0, %v2341
        %v2343 = vrcp.pop %v2285
        %v2344 = vmul.f32 1.0, %v2343
        %v2345 = vrcp.pop %v2286
        %v2346 = vmul.f32 1.0, %v2345
        %v2347 = vrcp.pop %v2287
        %v2348 = vmul.f32 1.0, %v2347
        %v2349 = vrcp.pop %v2288
        %v2350 = vmul.f32 1.0, %v2349
        %v2351 = vrcp.pop %v2289
        %v2352 = vmul.f32 1.0, %v2351
        %v2353 = vrcp.pop %v2290
        %v2354 = vmul.f32 1.0, %v2353
        %v2355 = vtanh.pop %v2131
        %v2356 = vtanh.pop %v2132
        %v2357 = vtanh.pop %v2133
        %v2358 = vtanh.pop %v2134
        %v2359 = vtanh.pop %v2135
        %v2360 = vtanh.pop %v2136
        %v2361 = vtanh.pop %v2137
        %v2362 = vtanh.pop %v2138
        %v2363 = vtanh.pop %v2139
        %v2364 = vtanh.pop %v2140
        %v2365 = vtanh.pop %v2141
        %v2366 = vtanh.pop %v2142
        %v2367 = vtanh.pop %v2143
        %v2368 = vtanh.pop %v2144
        %v2369 = vtanh.pop %v2145
        %v2370 = vtanh.pop %v2146
        %v2371 = vtanh.pop %v2147
        %v2372 = vtanh.pop %v2148
        %v2373 = vtanh.pop %v2149
        %v2374 = vtanh.pop %v2150
        %v2375 = vtanh.pop %v2151
        %v2376 = vtanh.pop %v2152
        %v2377 = vtanh.pop %v2153
        %v2378 = vtanh.pop %v2154
        %v2379 = vtanh.pop %v2155
        %v2380 = vtanh.pop %v2156
        %v2381 = vtanh.pop %v2157
        %v2382 = vtanh.pop %v2158
        %v2383 = vtanh.pop %v2159
        %v2384 = vtanh.pop %v2160
        %v2385 = vtanh.pop %v2161
        %v2386 = vtanh.pop %v2162
        %v2387 = vld [vmem:[#allocation3] sm:$0xff]
        %v2388 = vld [vmem:[#allocation3 + $0x8] sm:$0xff]
        %v2389 = vld [vmem:[#allocation3 + $0x10] sm:$0xff]
        %v2390 = vld [vmem:[#allocation3 + $0x18] sm:$0xff]
        %v2391 = vld [vmem:[#allocation3 + $0x20] sm:$0xff]
        %v2392 = vld [vmem:[#allocation3 + $0x28] sm:$0xff]
        %v2393 = vld [vmem:[#allocation3 + $0x30] sm:$0xff]
        %v2394 = vld [vmem:[#allocation3 + $0x38] sm:$0xff]
        %v2395 = vld [vmem:[#allocation3 + $0x40] sm:$0xff]
        %v2396 = vld [vmem:[#allocation3 + $0x48] sm:$0xff]
        %v2397 = vld [vmem:[#allocation3 + $0x50] sm:$0xff]
        %v2398 = vld [vmem:[#allocation3 + $0x58] sm:$0xff]
        %v2399 = vld [vmem:[#allocation3 + $0x60] sm:$0xff]
        %v2400 = vld [vmem:[#allocation3 + $0x68] sm:$0xff]
        %v2401 = vld [vmem:[#allocation3 + $0x70] sm:$0xff]
        %v2402 = vld [vmem:[#allocation3 + $0x78] sm:$0xff]
        %v2403 = vld [vmem:[#allocation3 + $0x80] sm:$0xff]
        %v2404 = vld [vmem:[#allocation3 + $0x88] sm:$0xff]
        %v2405 = vld [vmem:[#allocation3 + $0x90] sm:$0xff]
        %v2406 = vld [vmem:[#allocation3 + $0x98] sm:$0xff]
        %v2407 = vld [vmem:[#allocation3 + $0xa0] sm:$0xff]
        %v2408 = vld [vmem:[#allocation3 + $0xa8] sm:$0xff]
        %v2409 = vld [vmem:[#allocation3 + $0xb0] sm:$0xff]
        %v2410 = vld [vmem:[#allocation3 + $0xb8] sm:$0xff]
        %v2411 = vld [vmem:[#allocation3 + $0xc0] sm:$0xff]
        %v2412 = vld [vmem:[#allocation3 + $0xc8] sm:$0xff]
        %v2413 = vld [vmem:[#allocation3 + $0xd0] sm:$0xff]
        %v2414 = vld [vmem:[#allocation3 + $0xd8] sm:$0xff]
        %v2415 = vld [vmem:[#allocation3 + $0xe0] sm:$0xff]
        %v2416 = vld [vmem:[#allocation3 + $0xe8] sm:$0xff]
        %v2417 = vld [vmem:[#allocation3 + $0xf0] sm:$0xff]
        %v2418 = vld [vmem:[#allocation3 + $0xf8] sm:$0xff]
        %2451 = vrot.lane.b32.xlu0 %v2387, 32
        %v2452 = vpop.permute.xlu0 %2451
        %2453 = vrot.lane.b32.xlu0 %v2388, 32
        %v2454 = vpop.permute.xlu0 %2453
        %2455 = vrot.lane.b32.xlu0 %v2389, 32
        %v2456 = vpop.permute.xlu0 %2455
        %2457 = vrot.lane.b32.xlu0 %v2390, 32
        %v2458 = vpop.permute.xlu0 %2457
        %2459 = vrot.lane.b32.xlu0 %v2391, 32
        %v2460 = vpop.permute.xlu0 %2459
        %2461 = vrot.lane.b32.xlu0 %v2392, 32
        %v2462 = vpop.permute.xlu0 %2461
        %2463 = vrot.lane.b32.xlu0 %v2393, 32
        %v2464 = vpop.permute.xlu0 %2463
        %2465 = vrot.lane.b32.xlu0 %v2394, 32
        %v2466 = vpop.permute.xlu0 %2465
        %2467 = vrot.lane.b32.xlu0 %v2395, 32
        %v2468 = vpop.permute.xlu0 %2467
        %2469 = vrot.lane.b32.xlu0 %v2396, 32
        %v2470 = vpop.permute.xlu0 %2469
        %2471 = vrot.lane.b32.xlu0 %v2397, 32
        %v2472 = vpop.permute.xlu0 %2471
        %2473 = vrot.lane.b32.xlu0 %v2398, 32
        %v2474 = vpop.permute.xlu0 %2473
        %2475 = vrot.lane.b32.xlu0 %v2399, 32
        %v2476 = vpop.permute.xlu0 %2475
        %2477 = vrot.lane.b32.xlu0 %v2400, 32
        %v2478 = vpop.permute.xlu0 %2477
        %2479 = vrot.lane.b32.xlu0 %v2401, 32
        %v2480 = vpop.permute.xlu0 %2479
        %2481 = vrot.lane.b32.xlu0 %v2402, 32
        %v2482 = vpop.permute.xlu0 %2481
        %2483 = vrot.lane.b32.xlu0 %v2403, 32
        %v2484 = vpop.permute.xlu0 %2483
        %2485 = vrot.lane.b32.xlu0 %v2404, 32
        %v2486 = vpop.permute.xlu0 %2485
        %2487 = vrot.lane.b32.xlu0 %v2405, 32
        %v2488 = vpop.permute.xlu0 %2487
        %2489 = vrot.lane.b32.xlu0 %v2406, 32
        %v2490 = vpop.permute.xlu0 %2489
        %2491 = vrot.lane.b32.xlu0 %v2407, 32
        %v2492 = vpop.permute.xlu0 %2491
        %2493 = vrot.lane.b32.xlu0 %v2408, 32
        %v2494 = vpop.permute.xlu0 %2493
        %2495 = vrot.lane.b32.xlu0 %v2409, 32
        %v2496 = vpop.permute.xlu0 %2495
        %2497 = vrot.lane.b32.xlu0 %v2410, 32
        %v2498 = vpop.permute.xlu0 %2497
        %2499 = vrot.lane.b32.xlu0 %v2411, 32
        %v2500 = vpop.permute.xlu0 %2499
        %2501 = vrot.lane.b32.xlu0 %v2412, 32
        %v2502 = vpop.permute.xlu0 %2501
        %2503 = vrot.lane.b32.xlu0 %v2413, 32
        %v2504 = vpop.permute.xlu0 %2503
        %2505 = vrot.lane.b32.xlu0 %v2414, 32
        %v2506 = vpop.permute.xlu0 %2505
        %2507 = vrot.lane.b32.xlu0 %v2415, 32
        %v2508 = vpop.permute.xlu0 %2507
        %2509 = vrot.lane.b32.xlu0 %v2416, 32
        %v2510 = vpop.permute.xlu0 %2509
        %2511 = vrot.lane.b32.xlu0 %v2417, 32
        %v2512 = vpop.permute.xlu0 %2511
        %2513 = vrot.lane.b32.xlu0 %v2418, 32
        %v2514 = vpop.permute.xlu0 %2513
        %v2547 = vmul.f32 %v2292, %v2452
        %v2548 = vmul.f32 %v2294, %v2454
        %v2549 = vmul.f32 %v2296, %v2456
        %v2550 = vmul.f32 %v2298, %v2458
        %v2551 = vmul.f32 %v2300, %v2460
        %v2552 = vmul.f32 %v2302, %v2462
        %v2553 = vmul.f32 %v2304, %v2464
        %v2554 = vmul.f32 %v2306, %v2466
        %v2555 = vmul.f32 %v2308, %v2468
        %v2556 = vmul.f32 %v2310, %v2470
        %v2557 = vmul.f32 %v2312, %v2472
        %v2558 = vmul.f32 %v2314, %v2474
        %v2559 = vmul.f32 %v2316, %v2476
        %v2560 = vmul.f32 %v2318, %v2478
        %v2561 = vmul.f32 %v2320, %v2480
        %v2562 = vmul.f32 %v2322, %v2482
        %v2563 = vmul.f32 %v2324, %v2484
        %v2564 = vmul.f32 %v2326, %v2486
        %v2565 = vmul.f32 %v2328, %v2488
        %v2566 = vmul.f32 %v2330, %v2490
        %v2567 = vmul.f32 %v2332, %v2492
        %v2568 = vmul.f32 %v2334, %v2494
        %v2569 = vmul.f32 %v2336, %v2496
        %v2570 = vmul.f32 %v2338, %v2498
        %v2571 = vmul.f32 %v2340, %v2500
        %v2572 = vmul.f32 %v2342, %v2502
        %v2573 = vmul.f32 %v2344, %v2504
        %v2574 = vmul.f32 %v2346, %v2506
        %v2575 = vmul.f32 %v2348, %v2508
        %v2576 = vmul.f32 %v2350, %v2510
        %v2577 = vmul.f32 %v2352, %v2512
        %v2578 = vmul.f32 %v2354, %v2514
        %2611 = vrot.lane.b32.xlu0 %v2355, 32
        %v2612 = vpop.permute.xlu0 %2611
        %2613 = vrot.lane.b32.xlu0 %v2356, 32
        %v2614 = vpop.permute.xlu0 %2613
        %2615 = vrot.lane.b32.xlu0 %v2357, 32
        %v2616 = vpop.permute.xlu0 %2615
        %2617 = vrot.lane.b32.xlu0 %v2358, 32
        %v2618 = vpop.permute.xlu0 %2617
        %2619 = vrot.lane.b32.xlu0 %v2359, 32
        %v2620 = vpop.permute.xlu0 %2619
        %2621 = vrot.lane.b32.xlu0 %v2360, 32
        %v2622 = vpop.permute.xlu0 %2621
        %2623 = vrot.lane.b32.xlu0 %v2361, 32
        %v2624 = vpop.permute.xlu0 %2623
        %2625 = vrot.lane.b32.xlu0 %v2362, 32
        %v2626 = vpop.permute.xlu0 %2625
        %2627 = vrot.lane.b32.xlu0 %v2363, 32
        %v2628 = vpop.permute.xlu0 %2627
        %2629 = vrot.lane.b32.xlu0 %v2364, 32
        %v2630 = vpop.permute.xlu0 %2629
        %2631 = vrot.lane.b32.xlu0 %v2365, 32
        %v2632 = vpop.permute.xlu0 %2631
        %2633 = vrot.lane.b32.xlu0 %v2366, 32
        %v2634 = vpop.permute.xlu0 %2633
        %2635 = vrot.lane.b32.xlu0 %v2367, 32
        %v2636 = vpop.permute.xlu0 %2635
        %2637 = vrot.lane.b32.xlu0 %v2368, 32
        %v2638 = vpop.permute.xlu0 %2637
        %2639 = vrot.lane.b32.xlu0 %v2369, 32
        %v2640 = vpop.permute.xlu0 %2639
        %2641 = vrot.lane.b32.xlu0 %v2370, 32
        %v2642 = vpop.permute.xlu0 %2641
        %2643 = vrot.lane.b32.xlu0 %v2371, 32
        %v2644 = vpop.permute.xlu0 %2643
        %2645 = vrot.lane.b32.xlu0 %v2372, 32
        %v2646 = vpop.permute.xlu0 %2645
        %2647 = vrot.lane.b32.xlu0 %v2373, 32
        %v2648 = vpop.permute.xlu0 %2647
        %2649 = vrot.lane.b32.xlu0 %v2374, 32
        %v2650 = vpop.permute.xlu0 %2649
        %2651 = vrot.lane.b32.xlu0 %v2375, 32
        %v2652 = vpop.permute.xlu0 %2651
        %2653 = vrot.lane.b32.xlu0 %v2376, 32
        %v2654 = vpop.permute.xlu0 %2653
        %2655 = vrot.lane.b32.xlu0 %v2377, 32
        %v2656 = vpop.permute.xlu0 %2655
        %2657 = vrot.lane.b32.xlu0 %v2378, 32
        %v2658 = vpop.permute.xlu0 %2657
        %2659 = vrot.lane.b32.xlu0 %v2379, 32
        %v2660 = vpop.permute.xlu0 %2659
        %2661 = vrot.lane.b32.xlu0 %v2380, 32
        %v2662 = vpop.permute.xlu0 %2661
        %2663 = vrot.lane.b32.xlu0 %v2381, 32
        %v2664 = vpop.permute.xlu0 %2663
        %2665 = vrot.lane.b32.xlu0 %v2382, 32
        %v2666 = vpop.permute.xlu0 %2665
        %2667 = vrot.lane.b32.xlu0 %v2383, 32
        %v2668 = vpop.permute.xlu0 %2667
        %2669 = vrot.lane.b32.xlu0 %v2384, 32
        %v2670 = vpop.permute.xlu0 %2669
        %2671 = vrot.lane.b32.xlu0 %v2385, 32
        %v2672 = vpop.permute.xlu0 %2671
        %2673 = vrot.lane.b32.xlu0 %v2386, 32
        %v2674 = vpop.permute.xlu0 %2673
        %v2707 = vmul.f32 %v2292, %v2612
        %v2708 = vmul.f32 %v2294, %v2614
        %v2709 = vmul.f32 %v2296, %v2616
        %v2710 = vmul.f32 %v2298, %v2618
        %v2711 = vmul.f32 %v2300, %v2620
        %v2712 = vmul.f32 %v2302, %v2622
        %v2713 = vmul.f32 %v2304, %v2624
        %v2714 = vmul.f32 %v2306, %v2626
        %v2715 = vmul.f32 %v2308, %v2628
        %v2716 = vmul.f32 %v2310, %v2630
        %v2717 = vmul.f32 %v2312, %v2632
        %v2718 = vmul.f32 %v2314, %v2634
        %v2719 = vmul.f32 %v2316, %v2636
        %v2720 = vmul.f32 %v2318, %v2638
        %v2721 = vmul.f32 %v2320, %v2640
        %v2722 = vmul.f32 %v2322, %v2642
        %v2723 = vmul.f32 %v2324, %v2644
        %v2724 = vmul.f32 %v2326, %v2646
        %v2725 = vmul.f32 %v2328, %v2648
        %v2726 = vmul.f32 %v2330, %v2650
        %v2727 = vmul.f32 %v2332, %v2652
        %v2728 = vmul.f32 %v2334, %v2654
        %v2729 = vmul.f32 %v2336, %v2656
        %v2730 = vmul.f32 %v2338, %v2658
        %v2731 = vmul.f32 %v2340, %v2660
        %v2732 = vmul.f32 %v2342, %v2662
        %v2733 = vmul.f32 %v2344, %v2664
        %v2734 = vmul.f32 %v2346, %v2666
        %v2735 = vmul.f32 %v2348, %v2668
        %v2736 = vmul.f32 %v2350, %v2670
        %v2737 = vmul.f32 %v2352, %v2672
        %v2738 = vmul.f32 %v2354, %v2674
        %2771 = vrot.lane.b32.xlu0 %v2707, 32
        %v2772 = vpop.permute.xlu0 %2771
        %2773 = vrot.lane.b32.xlu0 %v2708, 32
        %v2774 = vpop.permute.xlu0 %2773
        %2775 = vrot.lane.b32.xlu0 %v2709, 32
        %v2776 = vpop.permute.xlu0 %2775
        %2777 = vrot.lane.b32.xlu0 %v2710, 32
        %v2778 = vpop.permute.xlu0 %2777
        %2779 = vrot.lane.b32.xlu0 %v2711, 32
        %v2780 = vpop.permute.xlu0 %2779
        %2781 = vrot.lane.b32.xlu0 %v2712, 32
        %v2782 = vpop.permute.xlu0 %2781
        %2783 = vrot.lane.b32.xlu0 %v2713, 32
        %v2784 = vpop.permute.xlu0 %2783
        %2785 = vrot.lane.b32.xlu0 %v2714, 32
        %v2786 = vpop.permute.xlu0 %2785
        %2787 = vrot.lane.b32.xlu0 %v2715, 32
        %v2788 = vpop.permute.xlu0 %2787
        %2789 = vrot.lane.b32.xlu0 %v2716, 32
        %v2790 = vpop.permute.xlu0 %2789
        %2791 = vrot.lane.b32.xlu0 %v2717, 32
        %v2792 = vpop.permute.xlu0 %2791
        %2793 = vrot.lane.b32.xlu0 %v2718, 32
        %v2794 = vpop.permute.xlu0 %2793
        %2795 = vrot.lane.b32.xlu0 %v2719, 32
        %v2796 = vpop.permute.xlu0 %2795
        %2797 = vrot.lane.b32.xlu0 %v2720, 32
        %v2798 = vpop.permute.xlu0 %2797
        %2799 = vrot.lane.b32.xlu0 %v2721, 32
        %v2800 = vpop.permute.xlu0 %2799
        %2801 = vrot.lane.b32.xlu0 %v2722, 32
        %v2802 = vpop.permute.xlu0 %2801
        %2803 = vrot.lane.b32.xlu0 %v2723, 32
        %v2804 = vpop.permute.xlu0 %2803
        %2805 = vrot.lane.b32.xlu0 %v2724, 32
        %v2806 = vpop.permute.xlu0 %2805
        %2807 = vrot.lane.b32.xlu0 %v2725, 32
        %v2808 = vpop.permute.xlu0 %2807
        %2809 = vrot.lane.b32.xlu0 %v2726, 32
        %v2810 = vpop.permute.xlu0 %2809
        %2811 = vrot.lane.b32.xlu0 %v2727, 32
        %v2812 = vpop.permute.xlu0 %2811
        %2813 = vrot.lane.b32.xlu0 %v2728, 32
        %v2814 = vpop.permute.xlu0 %2813
        %2815 = vrot.lane.b32.xlu0 %v2729, 32
        %v2816 = vpop.permute.xlu0 %2815
        %2817 = vrot.lane.b32.xlu0 %v2730, 32
        %v2818 = vpop.permute.xlu0 %2817
        %2819 = vrot.lane.b32.xlu0 %v2731, 32
        %v2820 = vpop.permute.xlu0 %2819
        %2821 = vrot.lane.b32.xlu0 %v2732, 32
        %v2822 = vpop.permute.xlu0 %2821
        %2823 = vrot.lane.b32.xlu0 %v2733, 32
        %v2824 = vpop.permute.xlu0 %2823
        %2825 = vrot.lane.b32.xlu0 %v2734, 32
        %v2826 = vpop.permute.xlu0 %2825
        %2827 = vrot.lane.b32.xlu0 %v2735, 32
        %v2828 = vpop.permute.xlu0 %2827
        %2829 = vrot.lane.b32.xlu0 %v2736, 32
        %v2830 = vpop.permute.xlu0 %2829
        %2831 = vrot.lane.b32.xlu0 %v2737, 32
        %v2832 = vpop.permute.xlu0 %2831
        %2833 = vrot.lane.b32.xlu0 %v2738, 32
        %v2834 = vpop.permute.xlu0 %2833
        %v2867 = vadd.f32 %v2547, %v2772
        %v2868 = vadd.f32 %v2548, %v2774
        %v2869 = vadd.f32 %v2549, %v2776
        %v2870 = vadd.f32 %v2550, %v2778
        %v2871 = vadd.f32 %v2551, %v2780
        %v2872 = vadd.f32 %v2552, %v2782
        %v2873 = vadd.f32 %v2553, %v2784
        %v2874 = vadd.f32 %v2554, %v2786
        %v2875 = vadd.f32 %v2555, %v2788
        %v2876 = vadd.f32 %v2556, %v2790
        %v2877 = vadd.f32 %v2557, %v2792
        %v2878 = vadd.f32 %v2558, %v2794
        %v2879 = vadd.f32 %v2559, %v2796
        %v2880 = vadd.f32 %v2560, %v2798
        %v2881 = vadd.f32 %v2561, %v2800
        %v2882 = vadd.f32 %v2562, %v2802
        %v2883 = vadd.f32 %v2563, %v2804
        %v2884 = vadd.f32 %v2564, %v2806
        %v2885 = vadd.f32 %v2565, %v2808
        %v2886 = vadd.f32 %v2566, %v2810
        %v2887 = vadd.f32 %v2567, %v2812
        %v2888 = vadd.f32 %v2568, %v2814
        %v2889 = vadd.f32 %v2569, %v2816
        %v2890 = vadd.f32 %v2570, %v2818
        %v2891 = vadd.f32 %v2571, %v2820
        %v2892 = vadd.f32 %v2572, %v2822
        %v2893 = vadd.f32 %v2573, %v2824
        %v2894 = vadd.f32 %v2574, %v2826
        %v2895 = vadd.f32 %v2575, %v2828
        %v2896 = vadd.f32 %v2576, %v2830
        %v2897 = vadd.f32 %v2577, %v2832
        %v2898 = vadd.f32 %v2578, %v2834
        %v2899 = vtanh.pop %v2867
        %v2900 = vtanh.pop %v2868
        %v2901 = vtanh.pop %v2869
        %v2902 = vtanh.pop %v2870
        %v2903 = vtanh.pop %v2871
        %v2904 = vtanh.pop %v2872
        %v2905 = vtanh.pop %v2873
        %v2906 = vtanh.pop %v2874
        %v2907 = vtanh.pop %v2875
        %v2908 = vtanh.pop %v2876
        %v2909 = vtanh.pop %v2877
        %v2910 = vtanh.pop %v2878
        %v2911 = vtanh.pop %v2879
        %v2912 = vtanh.pop %v2880
        %v2913 = vtanh.pop %v2881
        %v2914 = vtanh.pop %v2882
        %v2915 = vtanh.pop %v2883
        %v2916 = vtanh.pop %v2884
        %v2917 = vtanh.pop %v2885
        %v2918 = vtanh.pop %v2886
        %v2919 = vtanh.pop %v2887
        %v2920 = vtanh.pop %v2888
        %v2921 = vtanh.pop %v2889
        %v2922 = vtanh.pop %v2890
        %v2923 = vtanh.pop %v2891
        %v2924 = vtanh.pop %v2892
        %v2925 = vtanh.pop %v2893
        %v2926 = vtanh.pop %v2894
        %v2927 = vtanh.pop %v2895
        %v2928 = vtanh.pop %v2896
        %v2929 = vtanh.pop %v2897
        %v2930 = vtanh.pop %v2898
        %2963 = vrot.lane.b32.xlu0 %v2899, 32
        %v2964 = vpop.permute.xlu0 %2963
        %2965 = vrot.lane.b32.xlu0 %v2900, 32
        %v2966 = vpop.permute.xlu0 %2965
        %2967 = vrot.lane.b32.xlu0 %v2901, 32
        %v2968 = vpop.permute.xlu0 %2967
        %2969 = vrot.lane.b32.xlu0 %v2902, 32
        %v2970 = vpop.permute.xlu0 %2969
        %2971 = vrot.lane.b32.xlu0 %v2903, 32
        %v2972 = vpop.permute.xlu0 %2971
        %2973 = vrot.lane.b32.xlu0 %v2904, 32
        %v2974 = vpop.permute.xlu0 %2973
        %2975 = vrot.lane.b32.xlu0 %v2905, 32
        %v2976 = vpop.permute.xlu0 %2975
        %2977 = vrot.lane.b32.xlu0 %v2906, 32
        %v2978 = vpop.permute.xlu0 %2977
        %2979 = vrot.lane.b32.xlu0 %v2907, 32
        %v2980 = vpop.permute.xlu0 %2979
        %2981 = vrot.lane.b32.xlu0 %v2908, 32
        %v2982 = vpop.permute.xlu0 %2981
        %2983 = vrot.lane.b32.xlu0 %v2909, 32
        %v2984 = vpop.permute.xlu0 %2983
        %2985 = vrot.lane.b32.xlu0 %v2910, 32
        %v2986 = vpop.permute.xlu0 %2985
        %2987 = vrot.lane.b32.xlu0 %v2911, 32
        %v2988 = vpop.permute.xlu0 %2987
        %2989 = vrot.lane.b32.xlu0 %v2912, 32
        %v2990 = vpop.permute.xlu0 %2989
        %2991 = vrot.lane.b32.xlu0 %v2913, 32
        %v2992 = vpop.permute.xlu0 %2991
        %2993 = vrot.lane.b32.xlu0 %v2914, 32
        %v2994 = vpop.permute.xlu0 %2993
        %2995 = vrot.lane.b32.xlu0 %v2915, 32
        %v2996 = vpop.permute.xlu0 %2995
        %2997 = vrot.lane.b32.xlu0 %v2916, 32
        %v2998 = vpop.permute.xlu0 %2997
        %2999 = vrot.lane.b32.xlu0 %v2917, 32
        %v3000 = vpop.permute.xlu0 %2999
        %3001 = vrot.lane.b32.xlu0 %v2918, 32
        %v3002 = vpop.permute.xlu0 %3001
        %3003 = vrot.lane.b32.xlu0 %v2919, 32
        %v3004 = vpop.permute.xlu0 %3003
        %3005 = vrot.lane.b32.xlu0 %v2920, 32
        %v3006 = vpop.permute.xlu0 %3005
        %3007 = vrot.lane.b32.xlu0 %v2921, 32
        %v3008 = vpop.permute.xlu0 %3007
        %3009 = vrot.lane.b32.xlu0 %v2922, 32
        %v3010 = vpop.permute.xlu0 %3009
        %3011 = vrot.lane.b32.xlu0 %v2923, 32
        %v3012 = vpop.permute.xlu0 %3011
        %3013 = vrot.lane.b32.xlu0 %v2924, 32
        %v3014 = vpop.permute.xlu0 %3013
        %3015 = vrot.lane.b32.xlu0 %v2925, 32
        %v3016 = vpop.permute.xlu0 %3015
        %3017 = vrot.lane.b32.xlu0 %v2926, 32
        %v3018 = vpop.permute.xlu0 %3017
        %3019 = vrot.lane.b32.xlu0 %v2927, 32
        %v3020 = vpop.permute.xlu0 %3019
        %3021 = vrot.lane.b32.xlu0 %v2928, 32
        %v3022 = vpop.permute.xlu0 %3021
        %3023 = vrot.lane.b32.xlu0 %v2929, 32
        %v3024 = vpop.permute.xlu0 %3023
        %3025 = vrot.lane.b32.xlu0 %v2930, 32
        %v3026 = vpop.permute.xlu0 %3025
        %v3059 = vmul.f32 %v2292, %v2964
        %v3060 = vmul.f32 %v2294, %v2966
        %v3061 = vmul.f32 %v2296, %v2968
        %v3062 = vmul.f32 %v2298, %v2970
        %v3063 = vmul.f32 %v2300, %v2972
        %v3064 = vmul.f32 %v2302, %v2974
        %v3065 = vmul.f32 %v2304, %v2976
        %v3066 = vmul.f32 %v2306, %v2978
        %v3067 = vmul.f32 %v2308, %v2980
        %v3068 = vmul.f32 %v2310, %v2982
        %v3069 = vmul.f32 %v2312, %v2984
        %v3070 = vmul.f32 %v2314, %v2986
        %v3071 = vmul.f32 %v2316, %v2988
        %v3072 = vmul.f32 %v2318, %v2990
        %v3073 = vmul.f32 %v2320, %v2992
        %v3074 = vmul.f32 %v2322, %v2994
        %v3075 = vmul.f32 %v2324, %v2996
        %v3076 = vmul.f32 %v2326, %v2998
        %v3077 = vmul.f32 %v2328, %v3000
        %v3078 = vmul.f32 %v2330, %v3002
        %v3079 = vmul.f32 %v2332, %v3004
        %v3080 = vmul.f32 %v2334, %v3006
        %v3081 = vmul.f32 %v2336, %v3008
        %v3082 = vmul.f32 %v2338, %v3010
        %v3083 = vmul.f32 %v2340, %v3012
        %v3084 = vmul.f32 %v2342, %v3014
        %v3085 = vmul.f32 %v2344, %v3016
        %v3086 = vmul.f32 %v2346, %v3018
        %v3087 = vmul.f32 %v2348, %v3020
        %v3088 = vmul.f32 %v2350, %v3022
        %v3089 = vmul.f32 %v2352, %v3024
        %v3090 = vmul.f32 %v2354, %v3026
        %3123 = vrot.lane.b32.xlu0 %v2867, 96
        %v3124 = vpop.permute.xlu0 %3123
        %3125 = vrot.lane.b32.xlu0 %v2868, 96
        %v3126 = vpop.permute.xlu0 %3125
        %3127 = vrot.lane.b32.xlu0 %v2869, 96
        %v3128 = vpop.permute.xlu0 %3127
        %3129 = vrot.lane.b32.xlu0 %v2870, 96
        %v3130 = vpop.permute.xlu0 %3129
        %3131 = vrot.lane.b32.xlu0 %v2871, 96
        %v3132 = vpop.permute.xlu0 %3131
        %3133 = vrot.lane.b32.xlu0 %v2872, 96
        %v3134 = vpop.permute.xlu0 %3133
        %3135 = vrot.lane.b32.xlu0 %v2873, 96
        %v3136 = vpop.permute.xlu0 %3135
        %3137 = vrot.lane.b32.xlu0 %v2874, 96
        %v3138 = vpop.permute.xlu0 %3137
        %3139 = vrot.lane.b32.xlu0 %v2875, 96
        %v3140 = vpop.permute.xlu0 %3139
        %3141 = vrot.lane.b32.xlu0 %v2876, 96
        %v3142 = vpop.permute.xlu0 %3141
        %3143 = vrot.lane.b32.xlu0 %v2877, 96
        %v3144 = vpop.permute.xlu0 %3143
        %3145 = vrot.lane.b32.xlu0 %v2878, 96
        %v3146 = vpop.permute.xlu0 %3145
        %3147 = vrot.lane.b32.xlu0 %v2879, 96
        %v3148 = vpop.permute.xlu0 %3147
        %3149 = vrot.lane.b32.xlu0 %v2880, 96
        %v3150 = vpop.permute.xlu0 %3149
        %3151 = vrot.lane.b32.xlu0 %v2881, 96
        %v3152 = vpop.permute.xlu0 %3151
        %3153 = vrot.lane.b32.xlu0 %v2882, 96
        %v3154 = vpop.permute.xlu0 %3153
        %3155 = vrot.lane.b32.xlu0 %v2883, 96
        %v3156 = vpop.permute.xlu0 %3155
        %3157 = vrot.lane.b32.xlu0 %v2884, 96
        %v3158 = vpop.permute.xlu0 %3157
        %3159 = vrot.lane.b32.xlu0 %v2885, 96
        %v3160 = vpop.permute.xlu0 %3159
        %3161 = vrot.lane.b32.xlu0 %v2886, 96
        %v3162 = vpop.permute.xlu0 %3161
        %3163 = vrot.lane.b32.xlu0 %v2887, 96
        %v3164 = vpop.permute.xlu0 %3163
        %3165 = vrot.lane.b32.xlu0 %v2888, 96
        %v3166 = vpop.permute.xlu0 %3165
        %3167 = vrot.lane.b32.xlu0 %v2889, 96
        %v3168 = vpop.permute.xlu0 %3167
        %3169 = vrot.lane.b32.xlu0 %v2890, 96
        %v3170 = vpop.permute.xlu0 %3169
        %3171 = vrot.lane.b32.xlu0 %v2891, 96
        %v3172 = vpop.permute.xlu0 %3171
        %3173 = vrot.lane.b32.xlu0 %v2892, 96
        %v3174 = vpop.permute.xlu0 %3173
        %3175 = vrot.lane.b32.xlu0 %v2893, 96
        %v3176 = vpop.permute.xlu0 %3175
        %3177 = vrot.lane.b32.xlu0 %v2894, 96
        %v3178 = vpop.permute.xlu0 %3177
        %3179 = vrot.lane.b32.xlu0 %v2895, 96
        %v3180 = vpop.permute.xlu0 %3179
        %3181 = vrot.lane.b32.xlu0 %v2896, 96
        %v3182 = vpop.permute.xlu0 %3181
        %3183 = vrot.lane.b32.xlu0 %v2897, 96
        %v3184 = vpop.permute.xlu0 %3183
        %3185 = vrot.lane.b32.xlu0 %v2898, 96
        %v3186 = vpop.permute.xlu0 %3185
        %3219 = vst.msk [vmem:[#allocation3] sm:$0xff] %vm1342, %v3124
        %3220 = vst.msk [vmem:[#allocation3 + $0x8] sm:$0xff] %vm1342, %v3126
        %3221 = vst.msk [vmem:[#allocation3 + $0x10] sm:$0xff] %vm1342, %v3128
        %3222 = vst.msk [vmem:[#allocation3 + $0x18] sm:$0xff] %vm1342, %v3130
        %3223 = vst.msk [vmem:[#allocation3 + $0x20] sm:$0xff] %vm1342, %v3132
        %3224 = vst.msk [vmem:[#allocation3 + $0x28] sm:$0xff] %vm1342, %v3134
        %3225 = vst.msk [vmem:[#allocation3 + $0x30] sm:$0xff] %vm1342, %v3136
        %3226 = vst.msk [vmem:[#allocation3 + $0x38] sm:$0xff] %vm1342, %v3138
        %3227 = vst.msk [vmem:[#allocation3 + $0x40] sm:$0xff] %vm1342, %v3140
        %3228 = vst.msk [vmem:[#allocation3 + $0x48] sm:$0xff] %vm1342, %v3142
        %3229 = vst.msk [vmem:[#allocation3 + $0x50] sm:$0xff] %vm1342, %v3144
        %3230 = vst.msk [vmem:[#allocation3 + $0x58] sm:$0xff] %vm1342, %v3146
        %3231 = vst.msk [vmem:[#allocation3 + $0x60] sm:$0xff] %vm1342, %v3148
        %3232 = vst.msk [vmem:[#allocation3 + $0x68] sm:$0xff] %vm1342, %v3150
        %3233 = vst.msk [vmem:[#allocation3 + $0x70] sm:$0xff] %vm1342, %v3152
        %3234 = vst.msk [vmem:[#allocation3 + $0x78] sm:$0xff] %vm1342, %v3154
        %3235 = vst.msk [vmem:[#allocation3 + $0x80] sm:$0xff] %vm1342, %v3156
        %3236 = vst.msk [vmem:[#allocation3 + $0x88] sm:$0xff] %vm1342, %v3158
        %3237 = vst.msk [vmem:[#allocation3 + $0x90] sm:$0xff] %vm1342, %v3160
        %3238 = vst.msk [vmem:[#allocation3 + $0x98] sm:$0xff] %vm1342, %v3162
        %3239 = vst.msk [vmem:[#allocation3 + $0xa0] sm:$0xff] %vm1342, %v3164
        %3240 = vst.msk [vmem:[#allocation3 + $0xa8] sm:$0xff] %vm1342, %v3166
        %3241 = vst.msk [vmem:[#allocation3 + $0xb0] sm:$0xff] %vm1342, %v3168
        %3242 = vst.msk [vmem:[#allocation3 + $0xb8] sm:$0xff] %vm1342, %v3170
        %3243 = vst.msk [vmem:[#allocation3 + $0xc0] sm:$0xff] %vm1342, %v3172
        %3244 = vst.msk [vmem:[#allocation3 + $0xc8] sm:$0xff] %vm1342, %v3174
        %3245 = vst.msk [vmem:[#allocation3 + $0xd0] sm:$0xff] %vm1342, %v3176
        %3246 = vst.msk [vmem:[#allocation3 + $0xd8] sm:$0xff] %vm1342, %v3178
        %3247 = vst.msk [vmem:[#allocation3 + $0xe0] sm:$0xff] %vm1342, %v3180
        %3248 = vst.msk [vmem:[#allocation3 + $0xe8] sm:$0xff] %vm1342, %v3182
        %3249 = vst.msk [vmem:[#allocation3 + $0xf0] sm:$0xff] %vm1342, %v3184
        %3250 = vst.msk [vmem:[#allocation3 + $0xf8] sm:$0xff] %vm1342, %v3186
        %3283 = vrot.lane.b32.xlu0 %v3059, 64
        %v3284 = vpop.permute.xlu0 %3283
        %3285 = vrot.lane.b32.xlu0 %v3060, 64
        %v3286 = vpop.permute.xlu0 %3285
        %3287 = vrot.lane.b32.xlu0 %v3061, 64
        %v3288 = vpop.permute.xlu0 %3287
        %3289 = vrot.lane.b32.xlu0 %v3062, 64
        %v3290 = vpop.permute.xlu0 %3289
        %3291 = vrot.lane.b32.xlu0 %v3063, 64
        %v3292 = vpop.permute.xlu0 %3291
        %3293 = vrot.lane.b32.xlu0 %v3064, 64
        %v3294 = vpop.permute.xlu0 %3293
        %3295 = vrot.lane.b32.xlu0 %v3065, 64
        %v3296 = vpop.permute.xlu0 %3295
        %3297 = vrot.lane.b32.xlu0 %v3066, 64
        %v3298 = vpop.permute.xlu0 %3297
        %3299 = vrot.lane.b32.xlu0 %v3067, 64
        %v3300 = vpop.permute.xlu0 %3299
        %3301 = vrot.lane.b32.xlu0 %v3068, 64
        %v3302 = vpop.permute.xlu0 %3301
        %3303 = vrot.lane.b32.xlu0 %v3069, 64
        %v3304 = vpop.permute.xlu0 %3303
        %3305 = vrot.lane.b32.xlu0 %v3070, 64
        %v3306 = vpop.permute.xlu0 %3305
        %3307 = vrot.lane.b32.xlu0 %v3071, 64
        %v3308 = vpop.permute.xlu0 %3307
        %3309 = vrot.lane.b32.xlu0 %v3072, 64
        %v3310 = vpop.permute.xlu0 %3309
        %3311 = vrot.lane.b32.xlu0 %v3073, 64
        %v3312 = vpop.permute.xlu0 %3311
        %3313 = vrot.lane.b32.xlu0 %v3074, 64
        %v3314 = vpop.permute.xlu0 %3313
        %3315 = vrot.lane.b32.xlu0 %v3075, 64
        %v3316 = vpop.permute.xlu0 %3315
        %3317 = vrot.lane.b32.xlu0 %v3076, 64
        %v3318 = vpop.permute.xlu0 %3317
        %3319 = vrot.lane.b32.xlu0 %v3077, 64
        %v3320 = vpop.permute.xlu0 %3319
        %3321 = vrot.lane.b32.xlu0 %v3078, 64
        %v3322 = vpop.permute.xlu0 %3321
        %3323 = vrot.lane.b32.xlu0 %v3079, 64
        %v3324 = vpop.permute.xlu0 %3323
        %3325 = vrot.lane.b32.xlu0 %v3080, 64
        %v3326 = vpop.permute.xlu0 %3325
        %3327 = vrot.lane.b32.xlu0 %v3081, 64
        %v3328 = vpop.permute.xlu0 %3327
        %3329 = vrot.lane.b32.xlu0 %v3082, 64
        %v3330 = vpop.permute.xlu0 %3329
        %3331 = vrot.lane.b32.xlu0 %v3083, 64
        %v3332 = vpop.permute.xlu0 %3331
        %3333 = vrot.lane.b32.xlu0 %v3084, 64
        %v3334 = vpop.permute.xlu0 %3333
        %3335 = vrot.lane.b32.xlu0 %v3085, 64
        %v3336 = vpop.permute.xlu0 %3335
        %3337 = vrot.lane.b32.xlu0 %v3086, 64
        %v3338 = vpop.permute.xlu0 %3337
        %3339 = vrot.lane.b32.xlu0 %v3087, 64
        %v3340 = vpop.permute.xlu0 %3339
        %3341 = vrot.lane.b32.xlu0 %v3088, 64
        %v3342 = vpop.permute.xlu0 %3341
        %3343 = vrot.lane.b32.xlu0 %v3089, 64
        %v3344 = vpop.permute.xlu0 %3343
        %3345 = vrot.lane.b32.xlu0 %v3090, 64
        %v3346 = vpop.permute.xlu0 %3345
        %3379 = vst.msk [vmem:[%s380 + $0x8] sm:$0xff] %vm1342, %v3284
        %3380 = vst.msk [vmem:[%s380 + $0x10] sm:$0xff] %vm1342, %v3286
        %3381 = vst.msk [vmem:[%s380 + $0x28] sm:$0xff] %vm1342, %v3288
        %3382 = vst.msk [vmem:[%s380 + $0x30] sm:$0xff] %vm1342, %v3290
        %3383 = vst.msk [vmem:[%s380 + $0x48] sm:$0xff] %vm1342, %v3292
        %3384 = vst.msk [vmem:[%s380 + $0x50] sm:$0xff] %vm1342, %v3294
        %3385 = vst.msk [vmem:[%s380 + $0x68] sm:$0xff] %vm1342, %v3296
        %3386 = vst.msk [vmem:[%s380 + $0x70] sm:$0xff] %vm1342, %v3298
        %3387 = vst.msk [vmem:[%s380 + $0x88] sm:$0xff] %vm1342, %v3300
        %3388 = vst.msk [vmem:[%s380 + $0x90] sm:$0xff] %vm1342, %v3302
        %3389 = vst.msk [vmem:[%s380 + $0xa8] sm:$0xff] %vm1342, %v3304
        %3390 = vst.msk [vmem:[%s380 + $0xb0] sm:$0xff] %vm1342, %v3306
        %3391 = vst.msk [vmem:[%s380 + $0xc8] sm:$0xff] %vm1342, %v3308
        %3392 = vst.msk [vmem:[%s380 + $0xd0] sm:$0xff] %vm1342, %v3310
        %3393 = vst.msk [vmem:[%s380 + $0xe8] sm:$0xff] %vm1342, %v3312
        %3394 = vst.msk [vmem:[%s380 + $0xf0] sm:$0xff] %vm1342, %v3314
        %3395 = vst.msk [vmem:[%s380 + $0x108] sm:$0xff] %vm1342, %v3316
        %3396 = vst.msk [vmem:[%s380 + $0x110] sm:$0xff] %vm1342, %v3318
        %3397 = vst.msk [vmem:[%s380 + $0x128] sm:$0xff] %vm1342, %v3320
        %3398 = vst.msk [vmem:[%s380 + $0x130] sm:$0xff] %vm1342, %v3322
        %3399 = vst.msk [vmem:[%s380 + $0x148] sm:$0xff] %vm1342, %v3324
        %3400 = vst.msk [vmem:[%s380 + $0x150] sm:$0xff] %vm1342, %v3326
        %3401 = vst.msk [vmem:[%s380 + $0x168] sm:$0xff] %vm1342, %v3328
        %3402 = vst.msk [vmem:[%s380 + $0x170] sm:$0xff] %vm1342, %v3330
        %3403 = vst.msk [vmem:[%s380 + $0x188] sm:$0xff] %vm1342, %v3332
        %3404 = vst.msk [vmem:[%s380 + $0x190] sm:$0xff] %vm1342, %v3334
        %3405 = vst.msk [vmem:[%s380 + $0x1a8] sm:$0xff] %vm1342, %v3336
        %3406 = vst.msk [vmem:[%s380 + $0x1b0] sm:$0xff] %vm1342, %v3338
        %3407 = vst.msk [vmem:[%s380 + $0x1c8] sm:$0xff] %vm1342, %v3340
        %3408 = vst.msk [vmem:[%s380 + $0x1d0] sm:$0xff] %vm1342, %v3342
        %3409 = vst.msk [vmem:[%s380 + $0x1e8] sm:$0xff] %vm1342, %v3344
        %3410 = vst.msk [vmem:[%s380 + $0x1f0] sm:$0xff] %vm1342, %v3346
        %3411 = vst.msk [vmem:[%s162] sm:$0xff] %vm1342, %v3284
        %3412 = vst.msk [vmem:[%s162 + $0x8] sm:$0xff] %vm1342, %v3286
        %3413 = vst.msk [vmem:[%s162 + $0x10] sm:$0xff] %vm1342, %v3288
        %3414 = vst.msk [vmem:[%s162 + $0x18] sm:$0xff] %vm1342, %v3290
        %3415 = vst.msk [vmem:[%s162 + $0x20] sm:$0xff] %vm1342, %v3292
        %3416 = vst.msk [vmem:[%s162 + $0x28] sm:$0xff] %vm1342, %v3294
        %3417 = vst.msk [vmem:[%s162 + $0x30] sm:$0xff] %vm1342, %v3296
        %3418 = vst.msk [vmem:[%s162 + $0x38] sm:$0xff] %vm1342, %v3298
        %3419 = vst.msk [vmem:[%s162 + $0x40] sm:$0xff] %vm1342, %v3300
        %3420 = vst.msk [vmem:[%s162 + $0x48] sm:$0xff] %vm1342, %v3302
        %3421 = vst.msk [vmem:[%s162 + $0x50] sm:$0xff] %vm1342, %v3304
        %3422 = vst.msk [vmem:[%s162 + $0x58] sm:$0xff] %vm1342, %v3306
        %3423 = vst.msk [vmem:[%s162 + $0x60] sm:$0xff] %vm1342, %v3308
        %3424 = vst.msk [vmem:[%s162 + $0x68] sm:$0xff] %vm1342, %v3310
        %3425 = vst.msk [vmem:[%s162 + $0x70] sm:$0xff] %vm1342, %v3312
        %3426 = vst.msk [vmem:[%s162 + $0x78] sm:$0xff] %vm1342, %v3314
        %3427 = vst.msk [vmem:[%s162 + $0x80] sm:$0xff] %vm1342, %v3316
        %3428 = vst.msk [vmem:[%s162 + $0x88] sm:$0xff] %vm1342, %v3318
        %3429 = vst.msk [vmem:[%s162 + $0x90] sm:$0xff] %vm1342, %v3320
        %3430 = vst.msk [vmem:[%s162 + $0x98] sm:$0xff] %vm1342, %v3322
        %3431 = vst.msk [vmem:[%s162 + $0xa0] sm:$0xff] %vm1342, %v3324
        %3432 = vst.msk [vmem:[%s162 + $0xa8] sm:$0xff] %vm1342, %v3326
        %3433 = vst.msk [vmem:[%s162 + $0xb0] sm:$0xff] %vm1342, %v3328
        %3434 = vst.msk [vmem:[%s162 + $0xb8] sm:$0xff] %vm1342, %v3330
        %3435 = vst.msk [vmem:[%s162 + $0xc0] sm:$0xff] %vm1342, %v3332
        %3436 = vst.msk [vmem:[%s162 + $0xc8] sm:$0xff] %vm1342, %v3334
        %3437 = vst.msk [vmem:[%s162 + $0xd0] sm:$0xff] %vm1342, %v3336
        %3438 = vst.msk [vmem:[%s162 + $0xd8] sm:$0xff] %vm1342, %v3338
        %3439 = vst.msk [vmem:[%s162 + $0xe0] sm:$0xff] %vm1342, %v3340
        %3440 = vst.msk [vmem:[%s162 + $0xe8] sm:$0xff] %vm1342, %v3342
        %3441 = vst.msk [vmem:[%s162 + $0xf0] sm:$0xff] %vm1342, %v3344
        %3442 = vst.msk [vmem:[%s162 + $0xf8] sm:$0xff] %vm1342, %v3346
        %s3443 = sand.u32 %s91, 1
        %s3444 = scalar_lea.sflag [#allocation5], %s3443
        %s3445 = sand.u32 %s91, 1
        %s3446 = smul.addr %s3445, 256
        %s3447 = scalar_lea.vmem [#allocation4], %s3446
        // Predicated region
        $region33: #{conv_lstm_forward.1} parent=27 // pred_check
          %p3448 = pneg %p101
        $region34: #{conv_lstm_forward.1} parent=27 // pred_check_branch
          %3450 = sbr.rel (%p3448) target = $region36
        $region35: #{conv_lstm_forward.1} parent=27 // pred_region
          %s3451 = smul.u32 %s20, 8
          %s3452 = sadd.s32 %s3451, %s21
          %s3454 = ssub.s32 4096, 4096
          %3455 = vsyncadd %s3444, %s3454
          %s3456 = smul.addr %s3452, 32
          %s3457 = smul.addr %s3456, 128
          %s3458 = scalar_lea.hbm %s2, %s3457
          %s3459 = sshll.u32 %s3447, 4
          %s3460 = int_to_ptr.vmem [resolvable:$true] %s3459
          %3465 = dma.vmem_to_hbm [thread:$0]  %s3460, 4096, %s3458, %s3444, 128, 128, 8
        $region36: #{conv_lstm_forward.1} parent=27 // pred_fallthru
          _
      $region28: #{conv_lstm_forward.1} parent=5 // pred_fallthru
        _
      %p3466 = scmp.le.s32.totalorder 2, %s11
      // Predicated region
      $region37: #{conv_lstm_forward.1} parent=5 // pred_check
        %p3467 = pneg %p3466
      $region38: #{conv_lstm_forward.1} parent=5 // pred_check_branch
        %3469 = sbr.rel (%p3467) target = $region40
      $region39: #{conv_lstm_forward.1} parent=5 // pred_region
        %s3470 = ssub.s32 %s11, 2
        // Predicated region
        $region41: #{conv_lstm_forward.1} parent=39 // pred_check
          %p3471 = pneg %p107
        $region42: #{conv_lstm_forward.1} parent=39 // pred_check_branch
          %3473 = sbr.rel (%p3471) target = $region44
        $region43: #{conv_lstm_forward.1} parent=39 // pred_region
          %s3474 = sand.u32 %s92, 1
          %s3475 = scalar_lea.sflag [#allocation5], %s3474
          %s3476 = sand.u32 %s92, 1
          %s3477 = smul.addr %s3476, 256
          %s3478 = scalar_lea.vmem [#allocation4], %s3477
          %3479 = dma.done %s3475, 4096
        $region44: #{conv_lstm_forward.1} parent=39 // pred_fallthru
          _
      $region40: #{conv_lstm_forward.1} parent=5 // pred_fallthru
        _
    $region6: #{conv_lstm_forward.1} parent=1 // loop_footer
      %s15 = sadd.s32 1, %s11
    $region7: #{conv_lstm_forward.1} parent=1 // loop_footer_branch
      %10 = sbr.rel target = $region3
    $region8: #{conv_lstm_forward.1} parent=1 // loop_exit
      _
    %3480 = vsyncpa [#allocation5], 1
    %s3481 = scalar_lea.sflag [#allocation5], 1
    %3482 = vsyncpa %s3481, 1

</llo_original>
